<compile_context>
chip_gen: v5e
topology: v5e:2x2
jax: 0.10.0
libtpu: 0.0.40
codegen_flags: <defaults>
</compile_context>

<pallas_src>
import jax
import jax.numpy as jnp
from jax.experimental import pallas as pl
from jax.experimental.pallas import tpu as pltpu

DIM = 3
DIM_PAD = 8          # layer-1 contraction dim zero-padded to a full sublane tile
HID = 256


def _leaky_relu(x, slope=0.01):
    # For 0 < slope < 1, max(x, slope*x) == LeakyReLU(x): 2 VALU ops vs 3 for where().
    return jnp.maximum(x, slope * x)


def _make_kernel(epilogue_dtype):
    """epilogue_dtype: dtype of the layer-2/3 dot outputs + bias/LeakyReLU chain
    (bf16 on chips with a bf16 VPU, f32 otherwise)."""

    def kernel(xT_ref,            # (DIM_PAD, TM) f32, batch in lanes
               w1_ref, b1_ref,    # (HID, DIM_PAD) f32, (HID, 1) f32
               w2_ref, b2_ref,    # (HID, HID) bf16,    (HID, 1) epilogue_dtype
               w3_ref, b3_ref,    # (HID, HID) bf16,    (HID, 1) epilogue_dtype
               w4_ref, b4_ref,    # (8, HID) f32/bf16,  (1,) f32 in SMEM
               o_ref):            # (1, TM) f32
        # ---- Layer 1: Linear(3 -> 256) on the MXU (K zero-padded 3 -> 8).
        # f32 operands keep full input precision; K=8 makes this matmul tiny.
        h = jnp.dot(w1_ref[...], xT_ref[...], preferred_element_type=jnp.float32)
        h = _leaky_relu(h + b1_ref[...]).astype(jnp.bfloat16)
        # Dropout(0.2): identity in eval mode.

        # ---- Layer 2: Linear(256 -> 256): bf16 MXU operands, f32 accumulation.
        h = jnp.dot(w2_ref[...], h, preferred_element_type=epilogue_dtype)
        h = _leaky_relu(h + b2_ref[...]).astype(jnp.bfloat16)

        # ---- Layer 3: Linear(256 -> 256).
        h = jnp.dot(w3_ref[...], h, preferred_element_type=epilogue_dtype)
        h = _leaky_relu(h + b3_ref[...]).astype(w4_ref.dtype)

        # ---- Layer 4: Linear(256 -> 1) on the MXU.  w4 is zero-padded to 8 output
        # rows (only row 0 is real); the (1, TM) result row is lane-dense.
        y = jnp.dot(w4_ref[...], h, preferred_element_type=jnp.float32)
        o_ref[...] = jax.nn.sigmoid(y[0:1, :] + b4_ref[0])

    return kernel


def _device_has_bf16_vpu():
    """bf16 VALU exists on v6e and later; fall back to f32 elsewhere / on error."""
    try:
        kind = jax.devices()[0].device_kind.lower()
    except Exception:
        return False
    if "tpu" not in kind:
        return False
    return not any(tag in kind for tag in ("v2", "v3", "v4", "v5"))


def escape_model_forward(x, params, *, tile_m=1024, bf16_epilogue=None):
    """x: (N, 3) float32.  params in PyTorch nn.Linear layout: w (out, in), b (out,).
    Returns (N, 1) float32 (eval-mode forward)."""
    N, d = x.shape
    assert d == DIM
    assert tile_m % 128 == 0, "tile_m must be a multiple of 128 (lane width)"

    if bf16_epilogue is None:
        bf16_epilogue = _device_has_bf16_vpu()
    ep_dtype = jnp.bfloat16 if bf16_epilogue else jnp.float32

    # v7x megacore: keep at least 2 grid steps (when N allows) so the "parallel"
    # grid axis can feed both TensorCores; no-op cap on v5e/v6e.
    tile_m = min(tile_m, max(128, 128 * pl.cdiv(pl.cdiv(N, 2), 128)))

    # Ragged N: pad the batch up to a whole number of tiles, slice afterwards.
    n_tiles = pl.cdiv(N, tile_m)
    n_pad = n_tiles * tile_m

    # Pad batch (tail rows) and feature dim (3 -> 8), then put batch in lanes.
    xT = jnp.pad(x.astype(jnp.float32),
                 ((0, n_pad - N), (0, DIM_PAD - DIM))).T          # (8, n_pad)

    # Layout massaging (cheap, wrapper-side).
    w1 = jnp.pad(params["w1"].astype(jnp.float32),
                 ((0, 0), (0, DIM_PAD - DIM)))                    # (256, 8) f32
    b1 = params["b1"].astype(jnp.float32).reshape(HID, 1)
    w2 = params["w2"].astype(jnp.bfloat16)                        # (256, 256)
    b2 = params["b2"].astype(ep_dtype).reshape(HID, 1)
    w3 = params["w3"].astype(jnp.bfloat16)                        # (256, 256)
    b3 = params["b3"].astype(ep_dtype).reshape(HID, 1)
    w4 = jnp.pad(params["w4"].astype(ep_dtype).reshape(1, HID),
                 ((0, 7), (0, 0)))                                # (8, 256), row 0 real
    b4 = params["b4"].astype(jnp.float32).reshape(1)              # scalar -> SMEM

    # Constant-index weight blocks: the pipeline keeps them resident (no per-step
    # re-DMA); verified design intent — check the Mosaic dump if perf regresses.
    full = lambda shape: pl.BlockSpec(shape, lambda i: (0, 0))

    out = pl.pallas_call(
        _make_kernel(ep_dtype),
        out_shape=jax.ShapeDtypeStruct((1, n_pad), jnp.float32),
        grid_spec=pltpu.PrefetchScalarGridSpec(
            num_scalar_prefetch=0,
            grid=(n_tiles,),
            in_specs=[
                pl.BlockSpec((DIM_PAD, tile_m), lambda i: (0, i)),   # x^T tile
                full((HID, DIM_PAD)), full((HID, 1)),                # layer 1
                full((HID, HID)), full((HID, 1)),                    # layer 2
                full((HID, HID)), full((HID, 1)),                    # layer 3
                full((8, HID)),                                      # layer 4 weight
                pl.BlockSpec(memory_space=pltpu.MemorySpace.SMEM),   # b4 scalar
            ],
            out_specs=pl.BlockSpec((1, tile_m), lambda i: (0, i)),   # lane-dense
        ),
        compiler_params=pltpu.CompilerParams(
            dimension_semantics=("parallel",)),
    )(xT, w1, b1, w2, b2, w3, b3, w4, b4)

    return out[0, :N].reshape(N, 1)


def init_params(key):
    """Deterministic synthetic parameters, PyTorch nn.Linear layout."""
    ks = jax.random.split(key, 8)

    def lin(kw, kb, fan_in, fan_out):
        bound = 1.0 / float(fan_in) ** 0.5
        w = jax.random.uniform(kw, (fan_out, fan_in), jnp.float32, -bound, bound)
        b = jax.random.uniform(kb, (fan_out,), jnp.float32, -bound, bound)
        return w, b

    w1, b1 = lin(ks[0], ks[1], DIM, HID)
    w2, b2 = lin(ks[2], ks[3], HID, HID)
    w3, b3 = lin(ks[4], ks[5], HID, HID)
    w4, b4 = lin(ks[6], ks[7], HID, 1)
    return dict(w1=w1, b1=b1, w2=w2, b2=b2, w3=w3, b3=b3, w4=w4, b4=b4)


def reference_forward(x, p):
    """Pure-JAX f32 reference of the same forward pass (eval mode)."""
    lrelu = lambda v: jnp.where(v > 0, v, 0.01 * v)
    h = lrelu(x @ p["w1"].T + p["b1"])
    h = lrelu(h @ p["w2"].T + p["b2"])
    h = lrelu(h @ p["w3"].T + p["b3"])
    return jax.nn.sigmoid(h @ p["w4"].T + p["b4"])


if __name__ == "__main__":
    key = jax.random.PRNGKey(0)
    k_param, k_x = jax.random.split(key)

    params = init_params(k_param)

    # Small demo batch, deliberately ragged (not a multiple of the tile).
    N = 300
    x = jax.random.normal(k_x, (N, DIM), dtype=jnp.float32)

    # tile_m=256 -> 2 grid steps at this N (exercises the grid, megacore
    # sharding on v7x, and the padded tail).  Production default is 1024.
    out = escape_model_forward(x, params, tile_m=256)
    out = jax.block_until_ready(out)

    ref = reference_forward(x, params)
    assert out.shape == (N, 1)
    max_err = float(jnp.max(jnp.abs(out - ref)))
    # bf16 MXU operands (f32 accumulate) + optional bf16 epilogue loosen the
    # tolerance vs. the pure-f32 reference.
    assert max_err < 3e-2, f"max abs err {max_err}"

    print("KERNEL_OK")
</pallas_src>

<mosaic_0001>
module attributes {stable_mosaic.version = 11 : i64} {
  func.func @kernel(%arg0: i32, %arg1: memref<8x256xf32, #tpu.memory_space<vmem>>, %arg2: memref<256x8xf32, #tpu.memory_space<vmem>>, %arg3: memref<256x1xf32, #tpu.memory_space<vmem>>, %arg4: memref<256x256xbf16, #tpu.memory_space<vmem>>, %arg5: memref<256x1xf32, #tpu.memory_space<vmem>>, %arg6: memref<256x256xbf16, #tpu.memory_space<vmem>>, %arg7: memref<256x1xf32, #tpu.memory_space<vmem>>, %arg8: memref<8x256xf32, #tpu.memory_space<vmem>>, %arg9: memref<1xf32, #tpu.memory_space<smem>>, %arg10: memref<1x256xf32, #tpu.memory_space<vmem>>) attributes {dimension_semantics = [#tpu.dimension_semantics<parallel>], iteration_bounds = array<i64: 2>, scalar_prefetch = 0 : i64, scratch_operands = 0 : i64, tpu.core_type = #tpu.core_type<tc>, window_params = [{transform_indices = @transform_0, window_bounds = array<i64: 8, 256>}, {pipeline_mode = #tpu.pipeline_mode<synchronous>, transform_indices = @transform_1, window_bounds = array<i64: 256, 8>}, {pipeline_mode = #tpu.pipeline_mode<synchronous>, transform_indices = @transform_2, window_bounds = array<i64: 256, 1>}, {pipeline_mode = #tpu.pipeline_mode<synchronous>, transform_indices = @transform_3, window_bounds = array<i64: 256, 256>}, {pipeline_mode = #tpu.pipeline_mode<synchronous>, transform_indices = @transform_4, window_bounds = array<i64: 256, 1>}, {pipeline_mode = #tpu.pipeline_mode<synchronous>, transform_indices = @transform_5, window_bounds = array<i64: 256, 256>}, {pipeline_mode = #tpu.pipeline_mode<synchronous>, transform_indices = @transform_6, window_bounds = array<i64: 256, 1>}, {pipeline_mode = #tpu.pipeline_mode<synchronous>, transform_indices = @transform_7, window_bounds = array<i64: 8, 256>}, {transform_indices = @transform_8, window_bounds = array<i64: 1>}, {transform_indices = @transform_9, window_bounds = array<i64: 1, 256>}]} {
    %c0 = arith.constant 0 : index
    %c0_0 = arith.constant 0 : index
    %0 = vector.load %arg2[%c0, %c0_0] : memref<256x8xf32, #tpu.memory_space<vmem>>, vector<256x8xf32>
    %c0_1 = arith.constant 0 : index
    %c0_2 = arith.constant 0 : index
    %1 = vector.load %arg1[%c0_1, %c0_2] : memref<8x256xf32, #tpu.memory_space<vmem>>, vector<8x256xf32>
    %cst = arith.constant dense<0.000000e+00> : vector<256x256xf32>
    %2 = tpu.matmul %0, %1, %cst {dimension_numbers = #tpu.dot_dimension_numbers<[1], [0], [0], [1], [0, 0, 1, 1], [], []>} : vector<256x8xf32>, vector<8x256xf32>, vector<256x256xf32> -> vector<256x256xf32>
    %c0_3 = arith.constant 0 : index
    %c0_4 = arith.constant 0 : index
    %3 = vector.load %arg3[%c0_3, %c0_4] : memref<256x1xf32, #tpu.memory_space<vmem>>, vector<256x1xf32>
    %4 = vector.broadcast %3 : vector<256x1xf32> to vector<256x256xf32>
    %5 = arith.addf %2, %4 : vector<256x256xf32>
    %cst_5 = arith.constant 0.00999999977 : f32
    %6 = vector.broadcast %cst_5 : f32 to vector<256x256xf32>
    %7 = arith.mulf %6, %5 : vector<256x256xf32>
    %8 = arith.maximumf %5, %7 : vector<256x256xf32>
    %9 = arith.truncf %8 : vector<256x256xf32> to vector<256x256xbf16>
    %c0_6 = arith.constant 0 : index
    %c0_7 = arith.constant 0 : index
    %10 = vector.load %arg4[%c0_6, %c0_7] : memref<256x256xbf16, #tpu.memory_space<vmem>>, vector<256x256xbf16>
    %cst_8 = arith.constant dense<0.000000e+00> : vector<256x256xf32>
    %11 = tpu.matmul %10, %9, %cst_8 {dimension_numbers = #tpu.dot_dimension_numbers<[1], [0], [0], [1], [0, 0, 1, 1], [], []>} : vector<256x256xbf16>, vector<256x256xbf16>, vector<256x256xf32> -> vector<256x256xf32>
    %c0_9 = arith.constant 0 : index
    %c0_10 = arith.constant 0 : index
    %12 = vector.load %arg5[%c0_9, %c0_10] : memref<256x1xf32, #tpu.memory_space<vmem>>, vector<256x1xf32>
    %13 = vector.broadcast %12 : vector<256x1xf32> to vector<256x256xf32>
    %14 = arith.addf %11, %13 : vector<256x256xf32>
    %cst_11 = arith.constant 0.00999999977 : f32
    %15 = vector.broadcast %cst_11 : f32 to vector<256x256xf32>
    %16 = arith.mulf %15, %14 : vector<256x256xf32>
    %17 = arith.maximumf %14, %16 : vector<256x256xf32>
    %18 = arith.truncf %17 : vector<256x256xf32> to vector<256x256xbf16>
    %c0_12 = arith.constant 0 : index
    %c0_13 = arith.constant 0 : index
    %19 = vector.load %arg6[%c0_12, %c0_13] : memref<256x256xbf16, #tpu.memory_space<vmem>>, vector<256x256xbf16>
    %cst_14 = arith.constant dense<0.000000e+00> : vector<256x256xf32>
    %20 = tpu.matmul %19, %18, %cst_14 {dimension_numbers = #tpu.dot_dimension_numbers<[1], [0], [0], [1], [0, 0, 1, 1], [], []>} : vector<256x256xbf16>, vector<256x256xbf16>, vector<256x256xf32> -> vector<256x256xf32>
    %c0_15 = arith.constant 0 : index
    %c0_16 = arith.constant 0 : index
    %21 = vector.load %arg7[%c0_15, %c0_16] : memref<256x1xf32, #tpu.memory_space<vmem>>, vector<256x1xf32>
    %22 = vector.broadcast %21 : vector<256x1xf32> to vector<256x256xf32>
    %23 = arith.addf %20, %22 : vector<256x256xf32>
    %cst_17 = arith.constant 0.00999999977 : f32
    %24 = vector.broadcast %cst_17 : f32 to vector<256x256xf32>
    %25 = arith.mulf %24, %23 : vector<256x256xf32>
    %26 = arith.maximumf %23, %25 : vector<256x256xf32>
    %c0_18 = arith.constant 0 : index
    %c0_19 = arith.constant 0 : index
    %27 = vector.load %arg8[%c0_18, %c0_19] : memref<8x256xf32, #tpu.memory_space<vmem>>, vector<8x256xf32>
    %cst_20 = arith.constant dense<0.000000e+00> : vector<8x256xf32>
    %28 = tpu.matmul %27, %26, %cst_20 {dimension_numbers = #tpu.dot_dimension_numbers<[1], [0], [0], [1], [0, 0, 1, 1], [], []>} : vector<8x256xf32>, vector<256x256xf32>, vector<8x256xf32> -> vector<8x256xf32>
    %29 = vector.extract_strided_slice %28 {offsets = [0, 0], sizes = [1, 256], strides = [1, 1]} : vector<8x256xf32> to vector<1x256xf32>
    %c0_21 = arith.constant 0 : index
    %30 = memref.load %arg9[%c0_21] : memref<1xf32, #tpu.memory_space<smem>>
    %31 = vector.broadcast %30 : f32 to vector<1x256xf32>
    %32 = arith.addf %29, %31 : vector<1x256xf32>
    %33 = arith.negf %32 : vector<1x256xf32>
    %34 = math.exp %33 : vector<1x256xf32>
    %cst_22 = arith.constant 1.000000e+00 : f32
    %35 = vector.broadcast %cst_22 : f32 to vector<1x256xf32>
    %36 = arith.addf %35, %34 : vector<1x256xf32>
    %37 = arith.divf %35, %36 : vector<1x256xf32>
    %c0_23 = arith.constant 0 : index
    %c0_24 = arith.constant 0 : index
    %38 = vector.load %arg10[%c0_23, %c0_24] : memref<1x256xf32, #tpu.memory_space<vmem>>, vector<1x256xf32>
    tpu.vector_store %arg10[%c0_23, %c0_24], %37 {strides = array<i32>} : memref<1x256xf32, #tpu.memory_space<vmem>>, vector<1x256xf32>,
    return
  }
  func.func @transform_0(%arg0: i32) -> (i32, i32) {
    %c0_i32 = arith.constant 0 : i32
    %c0_i32_0 = arith.constant 0 : i32
    return %c0_i32, %arg0 : i32, i32
  }
  func.func @transform_1(%arg0: i32) -> (i32, i32) {
    %c0_i32 = arith.constant 0 : i32
    %c0_i32_0 = arith.constant 0 : i32
    %c0_i32_1 = arith.constant 0 : i32
    return %c0_i32, %c0_i32_0 : i32, i32
  }
  func.func @transform_2(%arg0: i32) -> (i32, i32) {
    %c0_i32 = arith.constant 0 : i32
    %c0_i32_0 = arith.constant 0 : i32
    %c0_i32_1 = arith.constant 0 : i32
    return %c0_i32, %c0_i32_0 : i32, i32
  }
  func.func @transform_3(%arg0: i32) -> (i32, i32) {
    %c0_i32 = arith.constant 0 : i32
    %c0_i32_0 = arith.constant 0 : i32
    %c0_i32_1 = arith.constant 0 : i32
    return %c0_i32, %c0_i32_0 : i32, i32
  }
  func.func @transform_4(%arg0: i32) -> (i32, i32) {
    %c0_i32 = arith.constant 0 : i32
    %c0_i32_0 = arith.constant 0 : i32
    %c0_i32_1 = arith.constant 0 : i32
    return %c0_i32, %c0_i32_0 : i32, i32
  }
  func.func @transform_5(%arg0: i32) -> (i32, i32) {
    %c0_i32 = arith.constant 0 : i32
    %c0_i32_0 = arith.constant 0 : i32
    %c0_i32_1 = arith.constant 0 : i32
    return %c0_i32, %c0_i32_0 : i32, i32
  }
  func.func @transform_6(%arg0: i32) -> (i32, i32) {
    %c0_i32 = arith.constant 0 : i32
    %c0_i32_0 = arith.constant 0 : i32
    %c0_i32_1 = arith.constant 0 : i32
    return %c0_i32, %c0_i32_0 : i32, i32
  }
  func.func @transform_7(%arg0: i32) -> (i32, i32) {
    %c0_i32 = arith.constant 0 : i32
    %c0_i32_0 = arith.constant 0 : i32
    %c0_i32_1 = arith.constant 0 : i32
    return %c0_i32, %c0_i32_0 : i32, i32
  }
  func.func @transform_8(%arg0: i32) -> i32 {
    %c0_i32 = arith.constant 0 : i32
    %c0_i32_0 = arith.constant 0 : i32
    return %c0_i32 : i32
  }
  func.func @transform_9(%arg0: i32) -> (i32, i32) {
    %c0_i32 = arith.constant 0 : i32
    %c0_i32_0 = arith.constant 0 : i32
    return %c0_i32, %arg0 : i32, i32
  }
}

</mosaic_0001>

<llo_original>
// kernel: tpu_custom_call.1
$region0: #{tpu_custom_call.1}
  #allocation0 [shape = 'u32[]', space=smem, size = 0x4, offset = 0x4, fixed_abs, tag = 'smem constant byte address 0x4 - core index']
  #allocation1 [shape = 'u32[72,128]{1,0:T(1,128)}', space=vmem, size = 0x9000, scoped, tag = 'internal scratch']
  #allocation2 [shape = 'f32[1]{0:T(128)S(6)}', space=smem, size = 0x200, scoped, tag = 'scoped memory for tpu_custom_call.1']
  %s0 = inlined_call_operand.vmem [shape: f32[8,512], index: 0, kind: input, shape index: {}]
  %s1 = inlined_call_operand.vmem [shape: f32[256,8], index: 1, kind: input, shape index: {}]
  %s2 = inlined_call_operand.vmem [shape: f32[256,1], index: 2, kind: input, shape index: {}]
  %s3 = inlined_call_operand.vmem [shape: bf16[256,256], index: 3, kind: input, shape index: {}]
  %s4 = inlined_call_operand.vmem [shape: f32[256,1], index: 4, kind: input, shape index: {}]
  %s5 = inlined_call_operand.vmem [shape: bf16[256,256], index: 5, kind: input, shape index: {}]
  %s6 = inlined_call_operand.vmem [shape: f32[256,1], index: 6, kind: input, shape index: {}]
  %s7 = inlined_call_operand.vmem [shape: f32[8,256], index: 7, kind: input, shape index: {}]
  %s8 = inlined_call_operand.<no memory space> [shape: f32[1], index: 8, kind: input, shape index: {}]
  %s9 = inlined_call_operand.hbm [shape: f32[1,512], index: 9, kind: output, shape index: {}]
  %s10 = sld [smem:[#allocation0]]
  $region69: #{tpu_custom_call.1} parent=0
    _
  %s12 = ssub.s32 1, %s10
  %s13 = scalar_select 0, %s12, %s10
  %14 = sst [smem:[#allocation2]] %s8
  $region1: #{tpu_custom_call.1} parent=0
    #allocation3 [shape = 'u8[2048]{0}', space=vmem, size = 0x800, scoped, tag = 'output window, operand 0']
    #allocation4 [shape = 's32[2]{0}', space=sflag, size = 0x8, scoped, tag = 'scoped memory for tpu_custom_call.1']
    %15 = vsyncpa [#allocation4], 0
    %s16 = scalar_lea.sflag [#allocation4], 1
    %17 = vsyncpa %s16, 0
    loop: start=0, step=1, limit=4
    $region2: #{tpu_custom_call.1} parent=1 // loop_pre_header
      _
    $region3: #{tpu_custom_call.1} parent=1 // loop_header
      %s19 = sphi 0, %s23
      %p20 = scmp.ge.s32.totalorder %s19, 4
      %s29 = sphi 0, %s31
      %s32 = sphi 0, %s29
      %s33 = sphi 0, %s32
      %s49 = sphi 0, %s33
      %s53 = sphi 0, %s53
      %s55 = sphi 0, %s53
      %s56 = sphi 0, %s55
      %s70 = sphi 0, %s56
      %s74 = sphi 0, %s74
      %s76 = sphi 0, %s74
      %s77 = sphi 0, %s76
      %s91 = sphi 0, %s77
      %s95 = sphi 0, %s95
      %s97 = sphi 0, %s95
      %s98 = sphi 0, %s97
      %s112 = sphi 0, %s98
      %s116 = sphi 0, %s116
      %s118 = sphi 0, %s116
      %s119 = sphi 0, %s118
      %s133 = sphi 0, %s119
      %s137 = sphi 0, %s137
      %s139 = sphi 0, %s137
      %s140 = sphi 0, %s139
      %s154 = sphi 0, %s140
      %s158 = sphi 0, %s158
      %s160 = sphi 0, %s158
      %s161 = sphi 0, %s160
      %s175 = sphi 0, %s161
      %s179 = sphi 0, %s179
      %s181 = sphi 0, %s179
      %s182 = sphi 0, %s181
      %s196 = sphi 0, %s182
      %s200 = sphi 0, %s200
      %s202 = sphi 0, %s200
      %s203 = sphi 0, %s202
      %s217 = sphi 0, %s203
      %s223 = sphi 0, %s225
      %s226 = sphi 0, %s223
      %s227 = sphi 0, %s226
      %s243 = sphi 0, %s227
    $region4: #{tpu_custom_call.1} parent=1 // loop_header_branch
      %22 = sbr.rel (%p20) target = $region8
    $region5: #{tpu_custom_call.1} parent=1 // loop_body
      %s24 = ssub.s32 %s19, 1
      %s25 = ssub.s32 %s19, 2
      %s26 = sadd.s32 %s19, 1
      %s27 = ssub.s32 %s19, %s26
      %p28 = scmp.eq.s32.totalorder %s27, 0
      %s30 = sadd.s32 %s29, 1
      %s31 = scalar_select %p28, %s29, %s30
      %p34 = pneg %p28
      %p35 = scmp.eq.s32.totalorder %s19, 1
      %p36 = por %p34, %p35
      %p37 = scmp.ne.s32.totalorder %s29, %s32
      %p38 = scmp.eq.s32.totalorder %s19, 0
      %p39 = por %p37, %p38
      %p40 = scmp.ne.s32.totalorder %s29, %s32
      %p41 = scmp.eq.s32.totalorder %s24, 1
      %p42 = por %p40, %p41
      %p43 = scmp.ne.s32.totalorder %s32, %s33
      %p44 = scmp.eq.s32.totalorder %s24, 0
      %p45 = por %p43, %p44
      %p46 = scmp.ne.s32.totalorder %s32, %s33
      %p47 = scmp.eq.s32.totalorder %s25, 1
      %p48 = por %p46, %p47
      %p50 = scmp.ne.s32.totalorder %s33, %s49
      %p51 = scmp.eq.s32.totalorder %s25, 0
      %p52 = por %p50, %p51
      %s54 = sadd.s32 %s53, 1
      %p57 = scmp.eq.s32.totalorder %s19, 1
      %p58 = scmp.ne.s32.totalorder %s53, %s55
      %p59 = scmp.eq.s32.totalorder %s19, 0
      %p60 = por %p58, %p59
      %p61 = scmp.ne.s32.totalorder %s53, %s55
      %p62 = scmp.eq.s32.totalorder %s24, 1
      %p63 = por %p61, %p62
      %p64 = scmp.ne.s32.totalorder %s55, %s56
      %p65 = scmp.eq.s32.totalorder %s24, 0
      %p66 = por %p64, %p65
      %p67 = scmp.ne.s32.totalorder %s55, %s56
      %p68 = scmp.eq.s32.totalorder %s25, 1
      %p69 = por %p67, %p68
      %p71 = scmp.ne.s32.totalorder %s56, %s70
      %p72 = scmp.eq.s32.totalorder %s25, 0
      %p73 = por %p71, %p72
      %s75 = sadd.s32 %s74, 1
      %p78 = scmp.eq.s32.totalorder %s19, 1
      %p79 = scmp.ne.s32.totalorder %s74, %s76
      %p80 = scmp.eq.s32.totalorder %s19, 0
      %p81 = por %p79, %p80
      %p82 = scmp.ne.s32.totalorder %s74, %s76
      %p83 = scmp.eq.s32.totalorder %s24, 1
      %p84 = por %p82, %p83
      %p85 = scmp.ne.s32.totalorder %s76, %s77
      %p86 = scmp.eq.s32.totalorder %s24, 0
      %p87 = por %p85, %p86
      %p88 = scmp.ne.s32.totalorder %s76, %s77
      %p89 = scmp.eq.s32.totalorder %s25, 1
      %p90 = por %p88, %p89
      %p92 = scmp.ne.s32.totalorder %s77, %s91
      %p93 = scmp.eq.s32.totalorder %s25, 0
      %p94 = por %p92, %p93
      %s96 = sadd.s32 %s95, 1
      %p99 = scmp.eq.s32.totalorder %s19, 1
      %p100 = scmp.ne.s32.totalorder %s95, %s97
      %p101 = scmp.eq.s32.totalorder %s19, 0
      %p102 = por %p100, %p101
      %p103 = scmp.ne.s32.totalorder %s95, %s97
      %p104 = scmp.eq.s32.totalorder %s24, 1
      %p105 = por %p103, %p104
      %p106 = scmp.ne.s32.totalorder %s97, %s98
      %p107 = scmp.eq.s32.totalorder %s24, 0
      %p108 = por %p106, %p107
      %p109 = scmp.ne.s32.totalorder %s97, %s98
      %p110 = scmp.eq.s32.totalorder %s25, 1
      %p111 = por %p109, %p110
      %p113 = scmp.ne.s32.totalorder %s98, %s112
      %p114 = scmp.eq.s32.totalorder %s25, 0
      %p115 = por %p113, %p114
      %s117 = sadd.s32 %s116, 1
      %p120 = scmp.eq.s32.totalorder %s19, 1
      %p121 = scmp.ne.s32.totalorder %s116, %s118
      %p122 = scmp.eq.s32.totalorder %s19, 0
      %p123 = por %p121, %p122
      %p124 = scmp.ne.s32.totalorder %s116, %s118
      %p125 = scmp.eq.s32.totalorder %s24, 1
      %p126 = por %p124, %p125
      %p127 = scmp.ne.s32.totalorder %s118, %s119
      %p128 = scmp.eq.s32.totalorder %s24, 0
      %p129 = por %p127, %p128
      %p130 = scmp.ne.s32.totalorder %s118, %s119
      %p131 = scmp.eq.s32.totalorder %s25, 1
      %p132 = por %p130, %p131
      %p134 = scmp.ne.s32.totalorder %s119, %s133
      %p135 = scmp.eq.s32.totalorder %s25, 0
      %p136 = por %p134, %p135
      %s138 = sadd.s32 %s137, 1
      %p141 = scmp.eq.s32.totalorder %s19, 1
      %p142 = scmp.ne.s32.totalorder %s137, %s139
      %p143 = scmp.eq.s32.totalorder %s19, 0
      %p144 = por %p142, %p143
      %p145 = scmp.ne.s32.totalorder %s137, %s139
      %p146 = scmp.eq.s32.totalorder %s24, 1
      %p147 = por %p145, %p146
      %p148 = scmp.ne.s32.totalorder %s139, %s140
      %p149 = scmp.eq.s32.totalorder %s24, 0
      %p150 = por %p148, %p149
      %p151 = scmp.ne.s32.totalorder %s139, %s140
      %p152 = scmp.eq.s32.totalorder %s25, 1
      %p153 = por %p151, %p152
      %p155 = scmp.ne.s32.totalorder %s140, %s154
      %p156 = scmp.eq.s32.totalorder %s25, 0
      %p157 = por %p155, %p156
      %s159 = sadd.s32 %s158, 1
      %p162 = scmp.eq.s32.totalorder %s19, 1
      %p163 = scmp.ne.s32.totalorder %s158, %s160
      %p164 = scmp.eq.s32.totalorder %s19, 0
      %p165 = por %p163, %p164
      %p166 = scmp.ne.s32.totalorder %s158, %s160
      %p167 = scmp.eq.s32.totalorder %s24, 1
      %p168 = por %p166, %p167
      %p169 = scmp.ne.s32.totalorder %s160, %s161
      %p170 = scmp.eq.s32.totalorder %s24, 0
      %p171 = por %p169, %p170
      %p172 = scmp.ne.s32.totalorder %s160, %s161
      %p173 = scmp.eq.s32.totalorder %s25, 1
      %p174 = por %p172, %p173
      %p176 = scmp.ne.s32.totalorder %s161, %s175
      %p177 = scmp.eq.s32.totalorder %s25, 0
      %p178 = por %p176, %p177
      %s180 = sadd.s32 %s179, 1
      %p183 = scmp.eq.s32.totalorder %s19, 1
      %p184 = scmp.ne.s32.totalorder %s179, %s181
      %p185 = scmp.eq.s32.totalorder %s19, 0
      %p186 = por %p184, %p185
      %p187 = scmp.ne.s32.totalorder %s179, %s181
      %p188 = scmp.eq.s32.totalorder %s24, 1
      %p189 = por %p187, %p188
      %p190 = scmp.ne.s32.totalorder %s181, %s182
      %p191 = scmp.eq.s32.totalorder %s24, 0
      %p192 = por %p190, %p191
      %p193 = scmp.ne.s32.totalorder %s181, %s182
      %p194 = scmp.eq.s32.totalorder %s25, 1
      %p195 = por %p193, %p194
      %p197 = scmp.ne.s32.totalorder %s182, %s196
      %p198 = scmp.eq.s32.totalorder %s25, 0
      %p199 = por %p197, %p198
      %s201 = sadd.s32 %s200, 1
      %p204 = scmp.eq.s32.totalorder %s19, 1
      %p205 = scmp.ne.s32.totalorder %s200, %s202
      %p206 = scmp.eq.s32.totalorder %s19, 0
      %p207 = por %p205, %p206
      %p208 = scmp.ne.s32.totalorder %s200, %s202
      %p209 = scmp.eq.s32.totalorder %s24, 1
      %p210 = por %p208, %p209
      %p211 = scmp.ne.s32.totalorder %s202, %s203
      %p212 = scmp.eq.s32.totalorder %s24, 0
      %p213 = por %p211, %p212
      %p214 = scmp.ne.s32.totalorder %s202, %s203
      %p215 = scmp.eq.s32.totalorder %s25, 1
      %p216 = por %p214, %p215
      %p218 = scmp.ne.s32.totalorder %s203, %s217
      %p219 = scmp.eq.s32.totalorder %s25, 0
      %p220 = por %p218, %p219
      %s221 = ssub.s32 %s19, %s26
      %p222 = scmp.eq.s32.totalorder %s221, 0
      %s224 = sadd.s32 %s223, 1
      %s225 = scalar_select %p222, %s223, %s224
      %p228 = pneg %p222
      %p229 = scmp.eq.s32.totalorder %s19, 1
      %p230 = por %p228, %p229
      %p231 = scmp.ne.s32.totalorder %s223, %s226
      %p232 = scmp.eq.s32.totalorder %s19, 0
      %p233 = por %p231, %p232
      %p234 = scmp.ne.s32.totalorder %s223, %s226
      %p235 = scmp.eq.s32.totalorder %s24, 1
      %p236 = por %p234, %p235
      %p237 = scmp.ne.s32.totalorder %s226, %s227
      %p238 = scmp.eq.s32.totalorder %s24, 0
      %p239 = por %p237, %p238
      %p240 = scmp.ne.s32.totalorder %s226, %s227
      %p241 = scmp.eq.s32.totalorder %s25, 1
      %p242 = por %p240, %p241
      %p244 = scmp.ne.s32.totalorder %s227, %s243
      %p245 = scmp.eq.s32.totalorder %s25, 0
      %p246 = por %p244, %p245
      %p247 = scmp.le.s32.totalorder 1, %s19
      %p248 = scmp.lt.s32.totalorder %s19, 3
      %p249 = pnand %p247, %p248
      %p250 = pneg %p249
      // Predicated region
      $region9: #{tpu_custom_call.1} parent=5 // pred_check
        _
      $region10: #{tpu_custom_call.1} parent=5 // pred_check_branch
        %252 = sbr.rel (%p249) target = $region12
      $region11: #{tpu_custom_call.1} parent=5 // pred_region
        %s253 = ssub.s32 %s19, 1
        // Predicated region
        $region13: #{tpu_custom_call.1} parent=11 // pred_check
          %p254 = pneg %p66
        $region14: #{tpu_custom_call.1} parent=11 // pred_check_branch
          %256 = sbr.rel (%p254) target = $region16
        $region15: #{tpu_custom_call.1} parent=11 // pred_region
          _
        $region16: #{tpu_custom_call.1} parent=11 // pred_fallthru
          _
        // Predicated region
        $region17: #{tpu_custom_call.1} parent=11 // pred_check
          %p257 = pneg %p87
        $region18: #{tpu_custom_call.1} parent=11 // pred_check_branch
          %259 = sbr.rel (%p257) target = $region20
        $region19: #{tpu_custom_call.1} parent=11 // pred_region
          _
        $region20: #{tpu_custom_call.1} parent=11 // pred_fallthru
          _
        // Predicated region
        $region21: #{tpu_custom_call.1} parent=11 // pred_check
          %p260 = pneg %p108
        $region22: #{tpu_custom_call.1} parent=11 // pred_check_branch
          %262 = sbr.rel (%p260) target = $region24
        $region23: #{tpu_custom_call.1} parent=11 // pred_region
          _
        $region24: #{tpu_custom_call.1} parent=11 // pred_fallthru
          _
        // Predicated region
        $region25: #{tpu_custom_call.1} parent=11 // pred_check
          %p263 = pneg %p129
        $region26: #{tpu_custom_call.1} parent=11 // pred_check_branch
          %265 = sbr.rel (%p263) target = $region28
        $region27: #{tpu_custom_call.1} parent=11 // pred_region
          _
        $region28: #{tpu_custom_call.1} parent=11 // pred_fallthru
          _
        // Predicated region
        $region29: #{tpu_custom_call.1} parent=11 // pred_check
          %p266 = pneg %p150
        $region30: #{tpu_custom_call.1} parent=11 // pred_check_branch
          %268 = sbr.rel (%p266) target = $region32
        $region31: #{tpu_custom_call.1} parent=11 // pred_region
          _
        $region32: #{tpu_custom_call.1} parent=11 // pred_fallthru
          _
        // Predicated region
        $region33: #{tpu_custom_call.1} parent=11 // pred_check
          %p269 = pneg %p171
        $region34: #{tpu_custom_call.1} parent=11 // pred_check_branch
          %271 = sbr.rel (%p269) target = $region36
        $region35: #{tpu_custom_call.1} parent=11 // pred_region
          _
        $region36: #{tpu_custom_call.1} parent=11 // pred_fallthru
          _
        // Predicated region
        $region37: #{tpu_custom_call.1} parent=11 // pred_check
          %p272 = pneg %p192
        $region38: #{tpu_custom_call.1} parent=11 // pred_check_branch
          %274 = sbr.rel (%p272) target = $region40
        $region39: #{tpu_custom_call.1} parent=11 // pred_region
          _
        $region40: #{tpu_custom_call.1} parent=11 // pred_fallthru
          _
        // Predicated region
        $region41: #{tpu_custom_call.1} parent=11 // pred_check
          %p275 = pneg %p213
        $region42: #{tpu_custom_call.1} parent=11 // pred_check_branch
          %277 = sbr.rel (%p275) target = $region44
        $region43: #{tpu_custom_call.1} parent=11 // pred_region
          _
        $region44: #{tpu_custom_call.1} parent=11 // pred_fallthru
          _
      $region12: #{tpu_custom_call.1} parent=5 // pred_fallthru
        _
      %p278 = scmp.lt.s32.totalorder %s19, 2
      // Predicated region
      $region45: #{tpu_custom_call.1} parent=5 // pred_check
        %p279 = pneg %p278
      $region46: #{tpu_custom_call.1} parent=5 // pred_check_branch
        %281 = sbr.rel (%p279) target = $region48
      $region47: #{tpu_custom_call.1} parent=5 // pred_region
        // Predicated region
        $region49: #{tpu_custom_call.1} parent=47 // pred_check
          %p282 = pneg %p39
        $region50: #{tpu_custom_call.1} parent=47 // pred_check_branch
          %284 = sbr.rel (%p282) target = $region52
        $region51: #{tpu_custom_call.1} parent=47 // pred_region
          %s285 = smul.u32 2, %s19
          %p286 = scmp.lt.s32.totalorder %s285, 3
          %s287 = scalar_select %p286, %s285, 3
          %s288 = smul.addr %s287, 8
          %s289 = scalar_lea.vmem %s0, %s288
          %s290 = smul.u32 2, %s19
        $region52: #{tpu_custom_call.1} parent=47 // pred_fallthru
          _
      $region48: #{tpu_custom_call.1} parent=5 // pred_fallthru
        _
      %p291 = scmp.le.s32.totalorder 1, %s19
      %p292 = scmp.lt.s32.totalorder %s19, 3
      %p293 = pnand %p291, %p292
      %p294 = pneg %p293
      // Predicated region
      $region53: #{tpu_custom_call.1} parent=5 // pred_check
        _
      $region54: #{tpu_custom_call.1} parent=5 // pred_check_branch
        %296 = sbr.rel (%p293) target = $region56
      $region55: #{tpu_custom_call.1} parent=5 // pred_region
        %s297 = ssub.s32 %s19, 1
        %s298 = smul.u32 2, %s24
        %p299 = scmp.lt.s32.totalorder %s298, 3
        %s300 = scalar_select %p299, %s298, 3
        %s301 = smul.addr %s300, 8
        %s302 = scalar_lea.vmem %s0, %s301
        %p303 = pneg %p45
        %p304 = pneg %p42
        %p305 = pneg %p66
        %p306 = pneg %p63
        %p307 = pneg %p87
        %p308 = pneg %p84
        %p309 = pneg %p108
        %p310 = pneg %p105
        %p311 = pneg %p129
        %p312 = pneg %p126
        %p313 = pneg %p150
        %p314 = pneg %p147
        %p315 = pneg %p171
        %p316 = pneg %p168
        %p317 = pneg %p192
        %p318 = pneg %p189
        %p319 = pneg %p213
        %p320 = pneg %p210
        %p321 = pneg %p239
        %p322 = pneg %p236
        %s323 = sand.u32 %s226, 1
        %s324 = scalar_lea.sflag [#allocation4], %s323
        %s325 = sand.u32 %s226, 1
        %s326 = smul.addr %s325, 2
        %s327 = scalar_lea.vmem [#allocation3], %s326
        %s328 = smul.u32 2, %s24
        %p329 = scmp.lt.s32.totalorder %s328, 3
        %s330 = scalar_select %p329, %s328, 3
        %s331 = smul.addr %s330, 8
        %s332 = scalar_lea.vmem %s0, %s331
        %s333 = smul.u32 2, %s24
        %s334 = smul.u32 2, %s24
        %v335 = vld [vmem:[%s1] sm:$0xff]
        %v336 = vld [vmem:[%s1 + $0x8] sm:$0xff]
        %v337 = vld [vmem:[%s1 + $0x10] sm:$0xff]
        %v338 = vld [vmem:[%s1 + $0x18] sm:$0xff]
        %v339 = vld [vmem:[%s1 + $0x20] sm:$0xff]
        %v340 = vld [vmem:[%s1 + $0x28] sm:$0xff]
        %v341 = vld [vmem:[%s1 + $0x30] sm:$0xff]
        %v342 = vld [vmem:[%s1 + $0x38] sm:$0xff]
        %v343 = vld [vmem:[%s1 + $0x40] sm:$0xff]
        %v344 = vld [vmem:[%s1 + $0x48] sm:$0xff]
        %v345 = vld [vmem:[%s1 + $0x50] sm:$0xff]
        %v346 = vld [vmem:[%s1 + $0x58] sm:$0xff]
        %v347 = vld [vmem:[%s1 + $0x60] sm:$0xff]
        %v348 = vld [vmem:[%s1 + $0x68] sm:$0xff]
        %v349 = vld [vmem:[%s1 + $0x70] sm:$0xff]
        %v350 = vld [vmem:[%s1 + $0x78] sm:$0xff]
        %v351 = vld [vmem:[%s1 + $0x80] sm:$0xff]
        %v352 = vld [vmem:[%s1 + $0x88] sm:$0xff]
        %v353 = vld [vmem:[%s1 + $0x90] sm:$0xff]
        %v354 = vld [vmem:[%s1 + $0x98] sm:$0xff]
        %v355 = vld [vmem:[%s1 + $0xa0] sm:$0xff]
        %v356 = vld [vmem:[%s1 + $0xa8] sm:$0xff]
        %v357 = vld [vmem:[%s1 + $0xb0] sm:$0xff]
        %v358 = vld [vmem:[%s1 + $0xb8] sm:$0xff]
        %v359 = vld [vmem:[%s1 + $0xc0] sm:$0xff]
        %v360 = vld [vmem:[%s1 + $0xc8] sm:$0xff]
        %v361 = vld [vmem:[%s1 + $0xd0] sm:$0xff]
        %v362 = vld [vmem:[%s1 + $0xd8] sm:$0xff]
        %v363 = vld [vmem:[%s1 + $0xe0] sm:$0xff]
        %v364 = vld [vmem:[%s1 + $0xe8] sm:$0xff]
        %v365 = vld [vmem:[%s1 + $0xf0] sm:$0xff]
        %v366 = vld [vmem:[%s1 + $0xf8] sm:$0xff]
        %v367 = vld [vmem:[%s332] sm:$0xff]
        %v368 = vld [vmem:[%s332 + $0x8] sm:$0xff]
        %v369 = vld [vmem:[%s2] sm:$0xff]
        %v370 = vld [vmem:[%s2 + $0x8] sm:$0xff]
        %v371 = vld [vmem:[%s2 + $0x10] sm:$0xff]
        %v372 = vld [vmem:[%s2 + $0x18] sm:$0xff]
        %v373 = vld [vmem:[%s2 + $0x20] sm:$0xff]
        %v374 = vld [vmem:[%s2 + $0x28] sm:$0xff]
        %v375 = vld [vmem:[%s2 + $0x30] sm:$0xff]
        %v376 = vld [vmem:[%s2 + $0x38] sm:$0xff]
        %v377 = vld [vmem:[%s2 + $0x40] sm:$0xff]
        %v378 = vld [vmem:[%s2 + $0x48] sm:$0xff]
        %v379 = vld [vmem:[%s2 + $0x50] sm:$0xff]
        %v380 = vld [vmem:[%s2 + $0x58] sm:$0xff]
        %v381 = vld [vmem:[%s2 + $0x60] sm:$0xff]
        %v382 = vld [vmem:[%s2 + $0x68] sm:$0xff]
        %v383 = vld [vmem:[%s2 + $0x70] sm:$0xff]
        %v384 = vld [vmem:[%s2 + $0x78] sm:$0xff]
        %v385 = vld [vmem:[%s2 + $0x80] sm:$0xff]
        %v386 = vld [vmem:[%s2 + $0x88] sm:$0xff]
        %v387 = vld [vmem:[%s2 + $0x90] sm:$0xff]
        %v388 = vld [vmem:[%s2 + $0x98] sm:$0xff]
        %v389 = vld [vmem:[%s2 + $0xa0] sm:$0xff]
        %v390 = vld [vmem:[%s2 + $0xa8] sm:$0xff]
        %v391 = vld [vmem:[%s2 + $0xb0] sm:$0xff]
        %v392 = vld [vmem:[%s2 + $0xb8] sm:$0xff]
        %v393 = vld [vmem:[%s2 + $0xc0] sm:$0xff]
        %v394 = vld [vmem:[%s2 + $0xc8] sm:$0xff]
        %v395 = vld [vmem:[%s2 + $0xd0] sm:$0xff]
        %v396 = vld [vmem:[%s2 + $0xd8] sm:$0xff]
        %v397 = vld [vmem:[%s2 + $0xe0] sm:$0xff]
        %v398 = vld [vmem:[%s2 + $0xe8] sm:$0xff]
        %v399 = vld [vmem:[%s2 + $0xf0] sm:$0xff]
        %v400 = vld [vmem:[%s2 + $0xf8] sm:$0xff]
        %402 = vset.pattern.permute.xlu0 0
        %403 = vperm.xlu0 %402, %v369
        %v404 = vpop.permute.xlu0 %403
        %407 = vset.pattern.permute.xlu0 0
        %408 = vperm.xlu0 %407, %v370
        %v409 = vpop.permute.xlu0 %408
        %412 = vset.pattern.permute.xlu0 0
        %413 = vperm.xlu0 %412, %v371
        %v414 = vpop.permute.xlu0 %413
        %417 = vset.pattern.permute.xlu0 0
        %418 = vperm.xlu0 %417, %v372
        %v419 = vpop.permute.xlu0 %418
        %422 = vset.pattern.permute.xlu0 0
        %423 = vperm.xlu0 %422, %v373
        %v424 = vpop.permute.xlu0 %423
        %427 = vset.pattern.permute.xlu0 0
        %428 = vperm.xlu0 %427, %v374
        %v429 = vpop.permute.xlu0 %428
        %432 = vset.pattern.permute.xlu0 0
        %433 = vperm.xlu0 %432, %v375
        %v434 = vpop.permute.xlu0 %433
        %437 = vset.pattern.permute.xlu0 0
        %438 = vperm.xlu0 %437, %v376
        %v439 = vpop.permute.xlu0 %438
        %442 = vset.pattern.permute.xlu0 0
        %443 = vperm.xlu0 %442, %v377
        %v444 = vpop.permute.xlu0 %443
        %447 = vset.pattern.permute.xlu0 0
        %448 = vperm.xlu0 %447, %v378
        %v449 = vpop.permute.xlu0 %448
        %452 = vset.pattern.permute.xlu0 0
        %453 = vperm.xlu0 %452, %v379
        %v454 = vpop.permute.xlu0 %453
        %457 = vset.pattern.permute.xlu0 0
        %458 = vperm.xlu0 %457, %v380
        %v459 = vpop.permute.xlu0 %458
        %462 = vset.pattern.permute.xlu0 0
        %463 = vperm.xlu0 %462, %v381
        %v464 = vpop.permute.xlu0 %463
        %467 = vset.pattern.permute.xlu0 0
        %468 = vperm.xlu0 %467, %v382
        %v469 = vpop.permute.xlu0 %468
        %472 = vset.pattern.permute.xlu0 0
        %473 = vperm.xlu0 %472, %v383
        %v474 = vpop.permute.xlu0 %473
        %477 = vset.pattern.permute.xlu0 0
        %478 = vperm.xlu0 %477, %v384
        %v479 = vpop.permute.xlu0 %478
        %482 = vset.pattern.permute.xlu0 0
        %483 = vperm.xlu0 %482, %v385
        %v484 = vpop.permute.xlu0 %483
        %487 = vset.pattern.permute.xlu0 0
        %488 = vperm.xlu0 %487, %v386
        %v489 = vpop.permute.xlu0 %488
        %492 = vset.pattern.permute.xlu0 0
        %493 = vperm.xlu0 %492, %v387
        %v494 = vpop.permute.xlu0 %493
        %497 = vset.pattern.permute.xlu0 0
        %498 = vperm.xlu0 %497, %v388
        %v499 = vpop.permute.xlu0 %498
        %502 = vset.pattern.permute.xlu0 0
        %503 = vperm.xlu0 %502, %v389
        %v504 = vpop.permute.xlu0 %503
        %507 = vset.pattern.permute.xlu0 0
        %508 = vperm.xlu0 %507, %v390
        %v509 = vpop.permute.xlu0 %508
        %512 = vset.pattern.permute.xlu0 0
        %513 = vperm.xlu0 %512, %v391
        %v514 = vpop.permute.xlu0 %513
        %517 = vset.pattern.permute.xlu0 0
        %518 = vperm.xlu0 %517, %v392
        %v519 = vpop.permute.xlu0 %518
        %522 = vset.pattern.permute.xlu0 0
        %523 = vperm.xlu0 %522, %v393
        %v524 = vpop.permute.xlu0 %523
        %527 = vset.pattern.permute.xlu0 0
        %528 = vperm.xlu0 %527, %v394
        %v529 = vpop.permute.xlu0 %528
        %532 = vset.pattern.permute.xlu0 0
        %533 = vperm.xlu0 %532, %v395
        %v534 = vpop.permute.xlu0 %533
        %537 = vset.pattern.permute.xlu0 0
        %538 = vperm.xlu0 %537, %v396
        %v539 = vpop.permute.xlu0 %538
        %542 = vset.pattern.permute.xlu0 0
        %543 = vperm.xlu0 %542, %v397
        %v544 = vpop.permute.xlu0 %543
        %547 = vset.pattern.permute.xlu0 0
        %548 = vperm.xlu0 %547, %v398
        %v549 = vpop.permute.xlu0 %548
        %552 = vset.pattern.permute.xlu0 0
        %553 = vperm.xlu0 %552, %v399
        %v554 = vpop.permute.xlu0 %553
        %557 = vset.pattern.permute.xlu0 0
        %558 = vperm.xlu0 %557, %v400
        %v559 = vpop.permute.xlu0 %558
        %vm561 = vcmask 64512
        %v563 = vsel %vm561, %v335, 0
        %v566 = vsel %vm561, %v336, 0
        %v569 = vsel %vm561, %v337, 0
        %v572 = vsel %vm561, %v338, 0
        %v575 = vsel %vm561, %v339, 0
        %v578 = vsel %vm561, %v340, 0
        %v581 = vsel %vm561, %v341, 0
        %v584 = vsel %vm561, %v342, 0
        %v587 = vsel %vm561, %v343, 0
        %v590 = vsel %vm561, %v344, 0
        %v593 = vsel %vm561, %v345, 0
        %v596 = vsel %vm561, %v346, 0
        %v599 = vsel %vm561, %v347, 0
        %v602 = vsel %vm561, %v348, 0
        %v605 = vsel %vm561, %v349, 0
        %v608 = vsel %vm561, %v350, 0
        %v611 = vsel %vm561, %v351, 0
        %v614 = vsel %vm561, %v352, 0
        %v617 = vsel %vm561, %v353, 0
        %v620 = vsel %vm561, %v354, 0
        %v623 = vsel %vm561, %v355, 0
        %v626 = vsel %vm561, %v356, 0
        %v629 = vsel %vm561, %v357, 0
        %v632 = vsel %vm561, %v358, 0
        %v635 = vsel %vm561, %v359, 0
        %v638 = vsel %vm561, %v360, 0
        %v641 = vsel %vm561, %v361, 0
        %v644 = vsel %vm561, %v362, 0
        %v647 = vsel %vm561, %v363, 0
        %v650 = vsel %vm561, %v364, 0
        %v653 = vsel %vm561, %v365, 0
        %v656 = vsel %vm561, %v366, 0
        %658 = vmatpush.msra.mxu0 0.0
        %659 = vmatpush.msra.mxu0 0.0
        %660 = vmatpush.msra.mxu0 0.0
        %661 = vmatpush.msra.mxu0 0.0
        %662 = vmatpush.msra.mxu0 0.0
        %663 = vmatpush.msra.mxu0 0.0
        %664 = vmatpush.msra.mxu0 0.0
        %665 = vmatpush.msra.mxu0 0.0
        %666 = vmatpush.msra.mxu0 0.0
        %667 = vmatpush.msra.mxu0 0.0
        %668 = vmatpush.msra.mxu0 0.0
        %669 = vmatpush.msra.mxu0 0.0
        %670 = vmatpush.msra.mxu0 0.0
        %671 = vmatpush.msra.mxu0 0.0
        %672 = vmatpush.msra.mxu0 0.0
        %673 = vmatpush.msra.mxu0 %v367
        %674 = vmatmul.f32.gmra.mxu0 %v563
        %v675 = vpop.f32.mrf.mxu0
        %v676 = vadd.f32 %v404, %v675
        %677 = vmatmul.f32.gmra.mxu0 %v566
        %v678 = vpop.f32.mrf.mxu0
        %v679 = vadd.f32 %v409, %v678
        %680 = vmatmul.f32.gmra.mxu0 %v569
        %v681 = vpop.f32.mrf.mxu0
        %v682 = vadd.f32 %v414, %v681
        %683 = vmatmul.f32.gmra.mxu0 %v572
        %v684 = vpop.f32.mrf.mxu0
        %v685 = vadd.f32 %v419, %v684
        %686 = vmatmul.f32.gmra.mxu0 %v575
        %v687 = vpop.f32.mrf.mxu0
        %v688 = vadd.f32 %v424, %v687
        %689 = vmatmul.f32.gmra.mxu0 %v578
        %v690 = vpop.f32.mrf.mxu0
        %v691 = vadd.f32 %v429, %v690
        %692 = vmatmul.f32.gmra.mxu0 %v581
        %v693 = vpop.f32.mrf.mxu0
        %v694 = vadd.f32 %v434, %v693
        %695 = vmatmul.f32.gmra.mxu0 %v584
        %v696 = vpop.f32.mrf.mxu0
        %v697 = vadd.f32 %v439, %v696
        %698 = vmatmul.f32.gmra.mxu0 %v587
        %v699 = vpop.f32.mrf.mxu0
        %v700 = vadd.f32 %v444, %v699
        %701 = vmatmul.f32.gmra.mxu0 %v590
        %v702 = vpop.f32.mrf.mxu0
        %v703 = vadd.f32 %v449, %v702
        %704 = vmatmul.f32.gmra.mxu0 %v593
        %v705 = vpop.f32.mrf.mxu0
        %v706 = vadd.f32 %v454, %v705
        %707 = vmatmul.f32.gmra.mxu0 %v596
        %v708 = vpop.f32.mrf.mxu0
        %v709 = vadd.f32 %v459, %v708
        %710 = vmatmul.f32.gmra.mxu0 %v599
        %v711 = vpop.f32.mrf.mxu0
        %v712 = vadd.f32 %v464, %v711
        %713 = vmatmul.f32.gmra.mxu0 %v602
        %v714 = vpop.f32.mrf.mxu0
        %v715 = vadd.f32 %v469, %v714
        %716 = vmatmul.f32.gmra.mxu0 %v605
        %v717 = vpop.f32.mrf.mxu0
        %v718 = vadd.f32 %v474, %v717
        %719 = vmatmul.f32.gmra.mxu0 %v608
        %v720 = vpop.f32.mrf.mxu0
        %v721 = vadd.f32 %v479, %v720
        %722 = vmatmul.f32.gmra.mxu0 %v611
        %v723 = vpop.f32.mrf.mxu0
        %v724 = vadd.f32 %v484, %v723
        %725 = vmatmul.f32.gmra.mxu0 %v614
        %v726 = vpop.f32.mrf.mxu0
        %v727 = vadd.f32 %v489, %v726
        %728 = vmatmul.f32.gmra.mxu0 %v617
        %v729 = vpop.f32.mrf.mxu0
        %v730 = vadd.f32 %v494, %v729
        %731 = vmatmul.f32.gmra.mxu0 %v620
        %v732 = vpop.f32.mrf.mxu0
        %v733 = vadd.f32 %v499, %v732
        %734 = vmatmul.f32.gmra.mxu0 %v623
        %v735 = vpop.f32.mrf.mxu0
        %v736 = vadd.f32 %v504, %v735
        %737 = vmatmul.f32.gmra.mxu0 %v626
        %v738 = vpop.f32.mrf.mxu0
        %v739 = vadd.f32 %v509, %v738
        %740 = vmatmul.f32.gmra.mxu0 %v629
        %v741 = vpop.f32.mrf.mxu0
        %v742 = vadd.f32 %v514, %v741
        %743 = vmatmul.f32.gmra.mxu0 %v632
        %v744 = vpop.f32.mrf.mxu0
        %v745 = vadd.f32 %v519, %v744
        %746 = vmatmul.f32.gmra.mxu0 %v635
        %v747 = vpop.f32.mrf.mxu0
        %v748 = vadd.f32 %v524, %v747
        %749 = vmatmul.f32.gmra.mxu0 %v638
        %v750 = vpop.f32.mrf.mxu0
        %v751 = vadd.f32 %v529, %v750
        %752 = vmatmul.f32.gmra.mxu0 %v641
        %v753 = vpop.f32.mrf.mxu0
        %v754 = vadd.f32 %v534, %v753
        %755 = vmatmul.f32.gmra.mxu0 %v644
        %v756 = vpop.f32.mrf.mxu0
        %v757 = vadd.f32 %v539, %v756
        %758 = vmatmul.f32.gmra.mxu0 %v647
        %v759 = vpop.f32.mrf.mxu0
        %v760 = vadd.f32 %v544, %v759
        %761 = vmatmul.f32.gmra.mxu0 %v650
        %v762 = vpop.f32.mrf.mxu0
        %v763 = vadd.f32 %v549, %v762
        %764 = vmatmul.f32.gmra.mxu0 %v653
        %v765 = vpop.f32.mrf.mxu0
        %v766 = vadd.f32 %v554, %v765
        %767 = vmatmul.f32.gmra.mxu0 %v656
        %v768 = vpop.f32.mrf.mxu0
        %v769 = vadd.f32 %v559, %v768
        %770 = vdwg.mxu0
        %771 = vmatpush.msra.mxu0 0.0
        %772 = vmatpush.msra.mxu0 0.0
        %773 = vmatpush.msra.mxu0 0.0
        %774 = vmatpush.msra.mxu0 0.0
        %775 = vmatpush.msra.mxu0 0.0
        %776 = vmatpush.msra.mxu0 0.0
        %777 = vmatpush.msra.mxu0 0.0
        %778 = vmatpush.msra.mxu0 0.0
        %779 = vmatpush.msra.mxu0 0.0
        %780 = vmatpush.msra.mxu0 0.0
        %781 = vmatpush.msra.mxu0 0.0
        %782 = vmatpush.msra.mxu0 0.0
        %783 = vmatpush.msra.mxu0 0.0
        %784 = vmatpush.msra.mxu0 0.0
        %785 = vmatpush.msra.mxu0 0.0
        %786 = vmatpush.msra.mxu0 %v368
        %787 = vmatmul.f32.gmra.mxu0 %v563
        %v788 = vpop.f32.mrf.mxu0
        %v789 = vadd.f32 %v404, %v788
        %790 = vmatmul.f32.gmra.mxu0 %v566
        %v791 = vpop.f32.mrf.mxu0
        %v792 = vadd.f32 %v409, %v791
        %793 = vmatmul.f32.gmra.mxu0 %v569
        %v794 = vpop.f32.mrf.mxu0
        %v795 = vadd.f32 %v414, %v794
        %796 = vmatmul.f32.gmra.mxu0 %v572
        %v797 = vpop.f32.mrf.mxu0
        %v798 = vadd.f32 %v419, %v797
        %799 = vmatmul.f32.gmra.mxu0 %v575
        %v800 = vpop.f32.mrf.mxu0
        %v801 = vadd.f32 %v424, %v800
        %802 = vmatmul.f32.gmra.mxu0 %v578
        %v803 = vpop.f32.mrf.mxu0
        %v804 = vadd.f32 %v429, %v803
        %805 = vmatmul.f32.gmra.mxu0 %v581
        %v806 = vpop.f32.mrf.mxu0
        %v807 = vadd.f32 %v434, %v806
        %808 = vmatmul.f32.gmra.mxu0 %v584
        %v809 = vpop.f32.mrf.mxu0
        %v810 = vadd.f32 %v439, %v809
        %811 = vmatmul.f32.gmra.mxu0 %v587
        %v812 = vpop.f32.mrf.mxu0
        %v813 = vadd.f32 %v444, %v812
        %814 = vmatmul.f32.gmra.mxu0 %v590
        %v815 = vpop.f32.mrf.mxu0
        %v816 = vadd.f32 %v449, %v815
        %817 = vmatmul.f32.gmra.mxu0 %v593
        %v818 = vpop.f32.mrf.mxu0
        %v819 = vadd.f32 %v454, %v818
        %820 = vmatmul.f32.gmra.mxu0 %v596
        %v821 = vpop.f32.mrf.mxu0
        %v822 = vadd.f32 %v459, %v821
        %823 = vmatmul.f32.gmra.mxu0 %v599
        %v824 = vpop.f32.mrf.mxu0
        %v825 = vadd.f32 %v464, %v824
        %826 = vmatmul.f32.gmra.mxu0 %v602
        %v827 = vpop.f32.mrf.mxu0
        %v828 = vadd.f32 %v469, %v827
        %829 = vmatmul.f32.gmra.mxu0 %v605
        %v830 = vpop.f32.mrf.mxu0
        %v831 = vadd.f32 %v474, %v830
        %832 = vmatmul.f32.gmra.mxu0 %v608
        %v833 = vpop.f32.mrf.mxu0
        %v834 = vadd.f32 %v479, %v833
        %835 = vmatmul.f32.gmra.mxu0 %v611
        %v836 = vpop.f32.mrf.mxu0
        %v837 = vadd.f32 %v484, %v836
        %838 = vmatmul.f32.gmra.mxu0 %v614
        %v839 = vpop.f32.mrf.mxu0
        %v840 = vadd.f32 %v489, %v839
        %841 = vmatmul.f32.gmra.mxu0 %v617
        %v842 = vpop.f32.mrf.mxu0
        %v843 = vadd.f32 %v494, %v842
        %844 = vmatmul.f32.gmra.mxu0 %v620
        %v845 = vpop.f32.mrf.mxu0
        %v846 = vadd.f32 %v499, %v845
        %847 = vmatmul.f32.gmra.mxu0 %v623
        %v848 = vpop.f32.mrf.mxu0
        %v849 = vadd.f32 %v504, %v848
        %850 = vmatmul.f32.gmra.mxu0 %v626
        %v851 = vpop.f32.mrf.mxu0
        %v852 = vadd.f32 %v509, %v851
        %853 = vmatmul.f32.gmra.mxu0 %v629
        %v854 = vpop.f32.mrf.mxu0
        %v855 = vadd.f32 %v514, %v854
        %856 = vmatmul.f32.gmra.mxu0 %v632
        %v857 = vpop.f32.mrf.mxu0
        %v858 = vadd.f32 %v519, %v857
        %859 = vmatmul.f32.gmra.mxu0 %v635
        %v860 = vpop.f32.mrf.mxu0
        %v861 = vadd.f32 %v524, %v860
        %862 = vmatmul.f32.gmra.mxu0 %v638
        %v863 = vpop.f32.mrf.mxu0
        %v864 = vadd.f32 %v529, %v863
        %865 = vmatmul.f32.gmra.mxu0 %v641
        %v866 = vpop.f32.mrf.mxu0
        %v867 = vadd.f32 %v534, %v866
        %868 = vmatmul.f32.gmra.mxu0 %v644
        %v869 = vpop.f32.mrf.mxu0
        %v870 = vadd.f32 %v539, %v869
        %871 = vmatmul.f32.gmra.mxu0 %v647
        %v872 = vpop.f32.mrf.mxu0
        %v873 = vadd.f32 %v544, %v872
        %874 = vmatmul.f32.gmra.mxu0 %v650
        %v875 = vpop.f32.mrf.mxu0
        %v876 = vadd.f32 %v549, %v875
        %877 = vmatmul.f32.gmra.mxu0 %v653
        %v878 = vpop.f32.mrf.mxu0
        %v879 = vadd.f32 %v554, %v878
        %880 = vmatmul.f32.gmra.mxu0 %v656
        %v881 = vpop.f32.mrf.mxu0
        %v882 = vadd.f32 %v559, %v881
        %883 = vdwg.mxu0
        %v884 = vmul.f32 %v676, 0.01
        %v885 = vmul.f32 %v789, 0.01
        %v886 = vmul.f32 %v679, 0.01
        %v887 = vmul.f32 %v792, 0.01
        %v888 = vmul.f32 %v682, 0.01
        %v889 = vmul.f32 %v795, 0.01
        %v890 = vmul.f32 %v685, 0.01
        %v891 = vmul.f32 %v798, 0.01
        %v892 = vmul.f32 %v688, 0.01
        %v893 = vmul.f32 %v801, 0.01
        %v894 = vmul.f32 %v691, 0.01
        %v895 = vmul.f32 %v804, 0.01
        %v896 = vmul.f32 %v694, 0.01
        %v897 = vmul.f32 %v807, 0.01
        %v898 = vmul.f32 %v697, 0.01
        %v899 = vmul.f32 %v810, 0.01
        %v900 = vmul.f32 %v700, 0.01
        %v901 = vmul.f32 %v813, 0.01
        %v902 = vmul.f32 %v703, 0.01
        %v903 = vmul.f32 %v816, 0.01
        %v904 = vmul.f32 %v706, 0.01
        %v905 = vmul.f32 %v819, 0.01
        %v906 = vmul.f32 %v709, 0.01
        %v907 = vmul.f32 %v822, 0.01
        %v908 = vmul.f32 %v712, 0.01
        %v909 = vmul.f32 %v825, 0.01
        %v910 = vmul.f32 %v715, 0.01
        %v911 = vmul.f32 %v828, 0.01
        %v912 = vmul.f32 %v718, 0.01
        %v913 = vmul.f32 %v831, 0.01
        %v914 = vmul.f32 %v721, 0.01
        %v915 = vmul.f32 %v834, 0.01
        %v916 = vmul.f32 %v724, 0.01
        %v917 = vmul.f32 %v837, 0.01
        %v918 = vmul.f32 %v727, 0.01
        %v919 = vmul.f32 %v840, 0.01
        %v920 = vmul.f32 %v730, 0.01
        %v921 = vmul.f32 %v843, 0.01
        %v922 = vmul.f32 %v733, 0.01
        %v923 = vmul.f32 %v846, 0.01
        %v924 = vmul.f32 %v736, 0.01
        %v925 = vmul.f32 %v849, 0.01
        %v926 = vmul.f32 %v739, 0.01
        %v927 = vmul.f32 %v852, 0.01
        %v928 = vmul.f32 %v742, 0.01
        %v929 = vmul.f32 %v855, 0.01
        %v930 = vmul.f32 %v745, 0.01
        %v931 = vmul.f32 %v858, 0.01
        %v932 = vmul.f32 %v748, 0.01
        %v933 = vmul.f32 %v861, 0.01
        %v934 = vmul.f32 %v751, 0.01
        %v935 = vmul.f32 %v864, 0.01
        %v936 = vmul.f32 %v754, 0.01
        %v937 = vmul.f32 %v867, 0.01
        %v938 = vmul.f32 %v757, 0.01
        %v939 = vmul.f32 %v870, 0.01
        %v940 = vmul.f32 %v760, 0.01
        %v941 = vmul.f32 %v873, 0.01
        %v942 = vmul.f32 %v763, 0.01
        %v943 = vmul.f32 %v876, 0.01
        %v944 = vmul.f32 %v766, 0.01
        %v945 = vmul.f32 %v879, 0.01
        %v946 = vmul.f32 %v769, 0.01
        %v947 = vmul.f32 %v882, 0.01
        %v948 = vmax.f32 %v676, %v884
        %v949 = vmax.f32 %v789, %v885
        %v950 = vmax.f32 %v679, %v886
        %v951 = vmax.f32 %v792, %v887
        %v952 = vmax.f32 %v682, %v888
        %v953 = vmax.f32 %v795, %v889
        %v954 = vmax.f32 %v685, %v890
        %v955 = vmax.f32 %v798, %v891
        %v956 = vmax.f32 %v688, %v892
        %v957 = vmax.f32 %v801, %v893
        %v958 = vmax.f32 %v691, %v894
        %v959 = vmax.f32 %v804, %v895
        %v960 = vmax.f32 %v694, %v896
        %v961 = vmax.f32 %v807, %v897
        %v962 = vmax.f32 %v697, %v898
        %v963 = vmax.f32 %v810, %v899
        %v964 = vmax.f32 %v700, %v900
        %v965 = vmax.f32 %v813, %v901
        %v966 = vmax.f32 %v703, %v902
        %v967 = vmax.f32 %v816, %v903
        %v968 = vmax.f32 %v706, %v904
        %v969 = vmax.f32 %v819, %v905
        %v970 = vmax.f32 %v709, %v906
        %v971 = vmax.f32 %v822, %v907
        %v972 = vmax.f32 %v712, %v908
        %v973 = vmax.f32 %v825, %v909
        %v974 = vmax.f32 %v715, %v910
        %v975 = vmax.f32 %v828, %v911
        %v976 = vmax.f32 %v718, %v912
        %v977 = vmax.f32 %v831, %v913
        %v978 = vmax.f32 %v721, %v914
        %v979 = vmax.f32 %v834, %v915
        %v980 = vmax.f32 %v724, %v916
        %v981 = vmax.f32 %v837, %v917
        %v982 = vmax.f32 %v727, %v918
        %v983 = vmax.f32 %v840, %v919
        %v984 = vmax.f32 %v730, %v920
        %v985 = vmax.f32 %v843, %v921
        %v986 = vmax.f32 %v733, %v922
        %v987 = vmax.f32 %v846, %v923
        %v988 = vmax.f32 %v736, %v924
        %v989 = vmax.f32 %v849, %v925
        %v990 = vmax.f32 %v739, %v926
        %v991 = vmax.f32 %v852, %v927
        %v992 = vmax.f32 %v742, %v928
        %v993 = vmax.f32 %v855, %v929
        %v994 = vmax.f32 %v745, %v930
        %v995 = vmax.f32 %v858, %v931
        %v996 = vmax.f32 %v748, %v932
        %v997 = vmax.f32 %v861, %v933
        %v998 = vmax.f32 %v751, %v934
        %v999 = vmax.f32 %v864, %v935
        %v1000 = vmax.f32 %v754, %v936
        %v1001 = vmax.f32 %v867, %v937
        %v1002 = vmax.f32 %v757, %v938
        %v1003 = vmax.f32 %v870, %v939
        %v1004 = vmax.f32 %v760, %v940
        %v1005 = vmax.f32 %v873, %v941
        %v1006 = vmax.f32 %v763, %v942
        %v1007 = vmax.f32 %v876, %v943
        %v1008 = vmax.f32 %v766, %v944
        %v1009 = vmax.f32 %v879, %v945
        %v1010 = vmax.f32 %v769, %v946
        %v1011 = vmax.f32 %v882, %v947
        %v1012 = vpack.c.bf16 %v950, %v948
        %v1013 = vpack.c.bf16 %v951, %v949
        %v1014 = vpack.c.bf16 %v954, %v952
        %v1015 = vpack.c.bf16 %v955, %v953
        %v1016 = vpack.c.bf16 %v958, %v956
        %v1017 = vpack.c.bf16 %v959, %v957
        %v1018 = vpack.c.bf16 %v962, %v960
        %v1019 = vpack.c.bf16 %v963, %v961
        %v1020 = vpack.c.bf16 %v966, %v964
        %v1021 = vpack.c.bf16 %v967, %v965
        %v1022 = vpack.c.bf16 %v970, %v968
        %v1023 = vpack.c.bf16 %v971, %v969
        %v1024 = vpack.c.bf16 %v974, %v972
        %v1025 = vpack.c.bf16 %v975, %v973
        %v1026 = vpack.c.bf16 %v978, %v976
        %v1027 = vpack.c.bf16 %v979, %v977
        %v1028 = vpack.c.bf16 %v982, %v980
        %v1029 = vpack.c.bf16 %v983, %v981
        %v1030 = vpack.c.bf16 %v986, %v984
        %v1031 = vpack.c.bf16 %v987, %v985
        %v1032 = vpack.c.bf16 %v990, %v988
        %v1033 = vpack.c.bf16 %v991, %v989
        %v1034 = vpack.c.bf16 %v994, %v992
        %v1035 = vpack.c.bf16 %v995, %v993
        %v1036 = vpack.c.bf16 %v998, %v996
        %v1037 = vpack.c.bf16 %v999, %v997
        %v1038 = vpack.c.bf16 %v1002, %v1000
        %v1039 = vpack.c.bf16 %v1003, %v1001
        %v1040 = vpack.c.bf16 %v1006, %v1004
        %v1041 = vpack.c.bf16 %v1007, %v1005
        %v1042 = vpack.c.bf16 %v1010, %v1008
        %v1043 = vpack.c.bf16 %v1011, %v1009
        %v1044 = vld [vmem:[%s3] sm:$0xff]
        %v1045 = vld [vmem:[%s3 + $0x8] sm:$0xff]
        %v1046 = vld [vmem:[%s3 + $0x10] sm:$0xff]
        %v1047 = vld [vmem:[%s3 + $0x18] sm:$0xff]
        %v1048 = vld [vmem:[%s3 + $0x20] sm:$0xff]
        %v1049 = vld [vmem:[%s3 + $0x28] sm:$0xff]
        %v1050 = vld [vmem:[%s3 + $0x30] sm:$0xff]
        %v1051 = vld [vmem:[%s3 + $0x38] sm:$0xff]
        %v1052 = vld [vmem:[%s3 + $0x40] sm:$0xff]
        %v1053 = vld [vmem:[%s3 + $0x48] sm:$0xff]
        %v1054 = vld [vmem:[%s3 + $0x50] sm:$0xff]
        %v1055 = vld [vmem:[%s3 + $0x58] sm:$0xff]
        %v1056 = vld [vmem:[%s3 + $0x60] sm:$0xff]
        %v1057 = vld [vmem:[%s3 + $0x68] sm:$0xff]
        %v1058 = vld [vmem:[%s3 + $0x70] sm:$0xff]
        %v1059 = vld [vmem:[%s3 + $0x78] sm:$0xff]
        %v1060 = vld [vmem:[%s3 + $0x80] sm:$0xff]
        %v1061 = vld [vmem:[%s3 + $0x88] sm:$0xff]
        %v1062 = vld [vmem:[%s3 + $0x90] sm:$0xff]
        %v1063 = vld [vmem:[%s3 + $0x98] sm:$0xff]
        %v1064 = vld [vmem:[%s3 + $0xa0] sm:$0xff]
        %v1065 = vld [vmem:[%s3 + $0xa8] sm:$0xff]
        %v1066 = vld [vmem:[%s3 + $0xb0] sm:$0xff]
        %v1067 = vld [vmem:[%s3 + $0xb8] sm:$0xff]
        %v1068 = vld [vmem:[%s3 + $0xc0] sm:$0xff]
        %v1069 = vld [vmem:[%s3 + $0xc8] sm:$0xff]
        %v1070 = vld [vmem:[%s3 + $0xd0] sm:$0xff]
        %v1071 = vld [vmem:[%s3 + $0xd8] sm:$0xff]
        %v1072 = vld [vmem:[%s3 + $0xe0] sm:$0xff]
        %v1073 = vld [vmem:[%s3 + $0xe8] sm:$0xff]
        %v1074 = vld [vmem:[%s3 + $0xf0] sm:$0xff]
        %v1075 = vld [vmem:[%s3 + $0xf8] sm:$0xff]
        %v1076 = vld [vmem:[%s4] sm:$0xff]
        %v1077 = vld [vmem:[%s4 + $0x8] sm:$0xff]
        %v1078 = vld [vmem:[%s4 + $0x10] sm:$0xff]
        %v1079 = vld [vmem:[%s4 + $0x18] sm:$0xff]
        %v1080 = vld [vmem:[%s4 + $0x20] sm:$0xff]
        %v1081 = vld [vmem:[%s4 + $0x28] sm:$0xff]
        %v1082 = vld [vmem:[%s4 + $0x30] sm:$0xff]
        %v1083 = vld [vmem:[%s4 + $0x38] sm:$0xff]
        %v1084 = vld [vmem:[%s4 + $0x40] sm:$0xff]
        %v1085 = vld [vmem:[%s4 + $0x48] sm:$0xff]
        %v1086 = vld [vmem:[%s4 + $0x50] sm:$0xff]
        %v1087 = vld [vmem:[%s4 + $0x58] sm:$0xff]
        %v1088 = vld [vmem:[%s4 + $0x60] sm:$0xff]
        %v1089 = vld [vmem:[%s4 + $0x68] sm:$0xff]
        %v1090 = vld [vmem:[%s4 + $0x70] sm:$0xff]
        %v1091 = vld [vmem:[%s4 + $0x78] sm:$0xff]
        %v1092 = vld [vmem:[%s4 + $0x80] sm:$0xff]
        %v1093 = vld [vmem:[%s4 + $0x88] sm:$0xff]
        %v1094 = vld [vmem:[%s4 + $0x90] sm:$0xff]
        %v1095 = vld [vmem:[%s4 + $0x98] sm:$0xff]
        %v1096 = vld [vmem:[%s4 + $0xa0] sm:$0xff]
        %v1097 = vld [vmem:[%s4 + $0xa8] sm:$0xff]
        %v1098 = vld [vmem:[%s4 + $0xb0] sm:$0xff]
        %v1099 = vld [vmem:[%s4 + $0xb8] sm:$0xff]
        %v1100 = vld [vmem:[%s4 + $0xc0] sm:$0xff]
        %v1101 = vld [vmem:[%s4 + $0xc8] sm:$0xff]
        %v1102 = vld [vmem:[%s4 + $0xd0] sm:$0xff]
        %v1103 = vld [vmem:[%s4 + $0xd8] sm:$0xff]
        %v1104 = vld [vmem:[%s4 + $0xe0] sm:$0xff]
        %v1105 = vld [vmem:[%s4 + $0xe8] sm:$0xff]
        %v1106 = vld [vmem:[%s4 + $0xf0] sm:$0xff]
        %v1107 = vld [vmem:[%s4 + $0xf8] sm:$0xff]
        %1109 = vset.pattern.permute.xlu0 0
        %1110 = vperm.xlu0 %1109, %v1076
        %v1111 = vpop.permute.xlu0 %1110
        %1114 = vset.pattern.permute.xlu0 0
        %1115 = vperm.xlu0 %1114, %v1077
        %v1116 = vpop.permute.xlu0 %1115
        %1119 = vset.pattern.permute.xlu0 0
        %1120 = vperm.xlu0 %1119, %v1078
        %v1121 = vpop.permute.xlu0 %1120
        %1124 = vset.pattern.permute.xlu0 0
        %1125 = vperm.xlu0 %1124, %v1079
        %v1126 = vpop.permute.xlu0 %1125
        %1129 = vset.pattern.permute.xlu0 0
        %1130 = vperm.xlu0 %1129, %v1080
        %v1131 = vpop.permute.xlu0 %1130
        %1134 = vset.pattern.permute.xlu0 0
        %1135 = vperm.xlu0 %1134, %v1081
        %v1136 = vpop.permute.xlu0 %1135
        %1139 = vset.pattern.permute.xlu0 0
        %1140 = vperm.xlu0 %1139, %v1082
        %v1141 = vpop.permute.xlu0 %1140
        %1144 = vset.pattern.permute.xlu0 0
        %1145 = vperm.xlu0 %1144, %v1083
        %v1146 = vpop.permute.xlu0 %1145
        %1149 = vset.pattern.permute.xlu0 0
        %1150 = vperm.xlu0 %1149, %v1084
        %v1151 = vpop.permute.xlu0 %1150
        %1154 = vset.pattern.permute.xlu0 0
        %1155 = vperm.xlu0 %1154, %v1085
        %v1156 = vpop.permute.xlu0 %1155
        %1159 = vset.pattern.permute.xlu0 0
        %1160 = vperm.xlu0 %1159, %v1086
        %v1161 = vpop.permute.xlu0 %1160
        %1164 = vset.pattern.permute.xlu0 0
        %1165 = vperm.xlu0 %1164, %v1087
        %v1166 = vpop.permute.xlu0 %1165
        %1169 = vset.pattern.permute.xlu0 0
        %1170 = vperm.xlu0 %1169, %v1088
        %v1171 = vpop.permute.xlu0 %1170
        %1174 = vset.pattern.permute.xlu0 0
        %1175 = vperm.xlu0 %1174, %v1089
        %v1176 = vpop.permute.xlu0 %1175
        %1179 = vset.pattern.permute.xlu0 0
        %1180 = vperm.xlu0 %1179, %v1090
        %v1181 = vpop.permute.xlu0 %1180
        %1184 = vset.pattern.permute.xlu0 0
        %1185 = vperm.xlu0 %1184, %v1091
        %v1186 = vpop.permute.xlu0 %1185
        %1189 = vset.pattern.permute.xlu0 0
        %1190 = vperm.xlu0 %1189, %v1092
        %v1191 = vpop.permute.xlu0 %1190
        %1194 = vset.pattern.permute.xlu0 0
        %1195 = vperm.xlu0 %1194, %v1093
        %v1196 = vpop.permute.xlu0 %1195
        %1199 = vset.pattern.permute.xlu0 0
        %1200 = vperm.xlu0 %1199, %v1094
        %v1201 = vpop.permute.xlu0 %1200
        %1204 = vset.pattern.permute.xlu0 0
        %1205 = vperm.xlu0 %1204, %v1095
        %v1206 = vpop.permute.xlu0 %1205
        %1209 = vset.pattern.permute.xlu0 0
        %1210 = vperm.xlu0 %1209, %v1096
        %v1211 = vpop.permute.xlu0 %1210
        %1214 = vset.pattern.permute.xlu0 0
        %1215 = vperm.xlu0 %1214, %v1097
        %v1216 = vpop.permute.xlu0 %1215
        %1219 = vset.pattern.permute.xlu0 0
        %1220 = vperm.xlu0 %1219, %v1098
        %v1221 = vpop.permute.xlu0 %1220
        %1224 = vset.pattern.permute.xlu0 0
        %1225 = vperm.xlu0 %1224, %v1099
        %v1226 = vpop.permute.xlu0 %1225
        %1229 = vset.pattern.permute.xlu0 0
        %1230 = vperm.xlu0 %1229, %v1100
        %v1231 = vpop.permute.xlu0 %1230
        %1234 = vset.pattern.permute.xlu0 0
        %1235 = vperm.xlu0 %1234, %v1101
        %v1236 = vpop.permute.xlu0 %1235
        %1239 = vset.pattern.permute.xlu0 0
        %1240 = vperm.xlu0 %1239, %v1102
        %v1241 = vpop.permute.xlu0 %1240
        %1244 = vset.pattern.permute.xlu0 0
        %1245 = vperm.xlu0 %1244, %v1103
        %v1246 = vpop.permute.xlu0 %1245
        %1249 = vset.pattern.permute.xlu0 0
        %1250 = vperm.xlu0 %1249, %v1104
        %v1251 = vpop.permute.xlu0 %1250
        %1254 = vset.pattern.permute.xlu0 0
        %1255 = vperm.xlu0 %1254, %v1105
        %v1256 = vpop.permute.xlu0 %1255
        %1259 = vset.pattern.permute.xlu0 0
        %1260 = vperm.xlu0 %1259, %v1106
        %v1261 = vpop.permute.xlu0 %1260
        %1264 = vset.pattern.permute.xlu0 0
        %1265 = vperm.xlu0 %1264, %v1107
        %v1266 = vpop.permute.xlu0 %1265
        %v1300 = vunpack.c.l.b16 %v1044
        %v1301 = vunpack.c.h.b16 %v1044
        %v1302 = vunpack.c.l.b16 %v1045
        %v1303 = vunpack.c.h.b16 %v1045
        %v1304 = vunpack.c.l.b16 %v1046
        %v1305 = vunpack.c.h.b16 %v1046
        %v1306 = vunpack.c.l.b16 %v1047
        %v1307 = vunpack.c.h.b16 %v1047
        %v1308 = vunpack.c.l.b16 %v1048
        %v1309 = vunpack.c.h.b16 %v1048
        %v1310 = vunpack.c.l.b16 %v1049
        %v1311 = vunpack.c.h.b16 %v1049
        %v1312 = vunpack.c.l.b16 %v1050
        %v1313 = vunpack.c.h.b16 %v1050
        %v1314 = vunpack.c.l.b16 %v1051
        %v1315 = vunpack.c.h.b16 %v1051
        %v1316 = vunpack.c.l.b16 %v1052
        %v1317 = vunpack.c.h.b16 %v1052
        %v1318 = vunpack.c.l.b16 %v1053
        %v1319 = vunpack.c.h.b16 %v1053
        %v1320 = vunpack.c.l.b16 %v1054
        %v1321 = vunpack.c.h.b16 %v1054
        %v1322 = vunpack.c.l.b16 %v1055
        %v1323 = vunpack.c.h.b16 %v1055
        %v1324 = vunpack.c.l.b16 %v1056
        %v1325 = vunpack.c.h.b16 %v1056
        %v1326 = vunpack.c.l.b16 %v1057
        %v1327 = vunpack.c.h.b16 %v1057
        %v1328 = vunpack.c.l.b16 %v1058
        %v1329 = vunpack.c.h.b16 %v1058
        %v1330 = vunpack.c.l.b16 %v1059
        %v1331 = vunpack.c.h.b16 %v1059
        %v1332 = vunpack.c.l.b16 %v1060
        %v1333 = vunpack.c.h.b16 %v1060
        %v1334 = vunpack.c.l.b16 %v1061
        %v1335 = vunpack.c.h.b16 %v1061
        %v1336 = vunpack.c.l.b16 %v1062
        %v1337 = vunpack.c.h.b16 %v1062
        %v1338 = vunpack.c.l.b16 %v1063
        %v1339 = vunpack.c.h.b16 %v1063
        %v1340 = vunpack.c.l.b16 %v1064
        %v1341 = vunpack.c.h.b16 %v1064
        %v1342 = vunpack.c.l.b16 %v1065
        %v1343 = vunpack.c.h.b16 %v1065
        %v1344 = vunpack.c.l.b16 %v1066
        %v1345 = vunpack.c.h.b16 %v1066
        %v1346 = vunpack.c.l.b16 %v1067
        %v1347 = vunpack.c.h.b16 %v1067
        %v1348 = vunpack.c.l.b16 %v1068
        %v1349 = vunpack.c.h.b16 %v1068
        %v1350 = vunpack.c.l.b16 %v1069
        %v1351 = vunpack.c.h.b16 %v1069
        %v1352 = vunpack.c.l.b16 %v1070
        %v1353 = vunpack.c.h.b16 %v1070
        %v1354 = vunpack.c.l.b16 %v1071
        %v1355 = vunpack.c.h.b16 %v1071
        %v1356 = vunpack.c.l.b16 %v1072
        %v1357 = vunpack.c.h.b16 %v1072
        %v1358 = vunpack.c.l.b16 %v1073
        %v1359 = vunpack.c.h.b16 %v1073
        %v1360 = vunpack.c.l.b16 %v1074
        %v1361 = vunpack.c.h.b16 %v1074
        %v1362 = vunpack.c.l.b16 %v1075
        %v1363 = vunpack.c.h.b16 %v1075
        %v1364 = vpack.c.b16 %v1302, %v1300
        %v1365 = vpack.c.b16 %v1303, %v1301
        %v1366 = vpack.c.b16 %v1306, %v1304
        %v1367 = vpack.c.b16 %v1307, %v1305
        %v1368 = vpack.c.b16 %v1310, %v1308
        %v1369 = vpack.c.b16 %v1311, %v1309
        %v1370 = vpack.c.b16 %v1314, %v1312
        %v1371 = vpack.c.b16 %v1315, %v1313
        %v1372 = vpack.c.b16 %v1318, %v1316
        %v1373 = vpack.c.b16 %v1319, %v1317
        %v1374 = vpack.c.b16 %v1322, %v1320
        %v1375 = vpack.c.b16 %v1323, %v1321
        %v1376 = vpack.c.b16 %v1326, %v1324
        %v1377 = vpack.c.b16 %v1327, %v1325
        %v1378 = vpack.c.b16 %v1330, %v1328
        %v1379 = vpack.c.b16 %v1331, %v1329
        %v1380 = vpack.c.b16 %v1334, %v1332
        %v1381 = vpack.c.b16 %v1335, %v1333
        %v1382 = vpack.c.b16 %v1338, %v1336
        %v1383 = vpack.c.b16 %v1339, %v1337
        %v1384 = vpack.c.b16 %v1342, %v1340
        %v1385 = vpack.c.b16 %v1343, %v1341
        %v1386 = vpack.c.b16 %v1346, %v1344
        %v1387 = vpack.c.b16 %v1347, %v1345
        %v1388 = vpack.c.b16 %v1350, %v1348
        %v1389 = vpack.c.b16 %v1351, %v1349
        %v1390 = vpack.c.b16 %v1354, %v1352
        %v1391 = vpack.c.b16 %v1355, %v1353
        %v1392 = vpack.c.b16 %v1358, %v1356
        %v1393 = vpack.c.b16 %v1359, %v1357
        %v1394 = vpack.c.b16 %v1362, %v1360
        %v1395 = vpack.c.b16 %v1363, %v1361
        %1428 = vmatpush.bf16.msra.mxu0 %v1026
        %1429 = vmatpush.bf16.msra.mxu0 %v1024
        %1430 = vmatpush.bf16.msra.mxu0 %v1022
        %1431 = vmatpush.bf16.msra.mxu0 %v1020
        %1432 = vmatpush.bf16.msra.mxu0 %v1018
        %1433 = vmatpush.bf16.msra.mxu0 %v1016
        %1434 = vmatpush.bf16.msra.mxu0 %v1014
        %1435 = vmatpush.bf16.msra.mxu0 %v1012
        %1436 = vmatmul.bf16.gmra.mxu0 %v1364
        %v1437 = vpop.f32.mrf.mxu0
        %v1438 = vadd.f32 %v1111, %v1437
        %v1439 = vpop.f32.mrf.mxu0
        %v1440 = vadd.f32 %v1116, %v1439
        %1441 = vmatmul.bf16.gmra.mxu0 %v1366
        %v1442 = vpop.f32.mrf.mxu0
        %v1443 = vadd.f32 %v1121, %v1442
        %v1444 = vpop.f32.mrf.mxu0
        %v1445 = vadd.f32 %v1126, %v1444
        %1446 = vmatmul.bf16.gmra.mxu0 %v1368
        %v1447 = vpop.f32.mrf.mxu0
        %v1448 = vadd.f32 %v1131, %v1447
        %v1449 = vpop.f32.mrf.mxu0
        %v1450 = vadd.f32 %v1136, %v1449
        %1451 = vmatmul.bf16.gmra.mxu0 %v1370
        %v1452 = vpop.f32.mrf.mxu0
        %v1453 = vadd.f32 %v1141, %v1452
        %v1454 = vpop.f32.mrf.mxu0
        %v1455 = vadd.f32 %v1146, %v1454
        %1456 = vmatmul.bf16.gmra.mxu0 %v1372
        %v1457 = vpop.f32.mrf.mxu0
        %v1458 = vadd.f32 %v1151, %v1457
        %v1459 = vpop.f32.mrf.mxu0
        %v1460 = vadd.f32 %v1156, %v1459
        %1461 = vmatmul.bf16.gmra.mxu0 %v1374
        %v1462 = vpop.f32.mrf.mxu0
        %v1463 = vadd.f32 %v1161, %v1462
        %v1464 = vpop.f32.mrf.mxu0
        %v1465 = vadd.f32 %v1166, %v1464
        %1466 = vmatmul.bf16.gmra.mxu0 %v1376
        %v1467 = vpop.f32.mrf.mxu0
        %v1468 = vadd.f32 %v1171, %v1467
        %v1469 = vpop.f32.mrf.mxu0
        %v1470 = vadd.f32 %v1176, %v1469
        %1471 = vmatmul.bf16.gmra.mxu0 %v1378
        %v1472 = vpop.f32.mrf.mxu0
        %v1473 = vadd.f32 %v1181, %v1472
        %v1474 = vpop.f32.mrf.mxu0
        %v1475 = vadd.f32 %v1186, %v1474
        %1476 = vmatmul.bf16.gmra.mxu0 %v1380
        %v1477 = vpop.f32.mrf.mxu0
        %v1478 = vadd.f32 %v1191, %v1477
        %v1479 = vpop.f32.mrf.mxu0
        %v1480 = vadd.f32 %v1196, %v1479
        %1481 = vmatmul.bf16.gmra.mxu0 %v1382
        %v1482 = vpop.f32.mrf.mxu0
        %v1483 = vadd.f32 %v1201, %v1482
        %v1484 = vpop.f32.mrf.mxu0
        %v1485 = vadd.f32 %v1206, %v1484
        %1486 = vmatmul.bf16.gmra.mxu0 %v1384
        %v1487 = vpop.f32.mrf.mxu0
        %v1488 = vadd.f32 %v1211, %v1487
        %v1489 = vpop.f32.mrf.mxu0
        %v1490 = vadd.f32 %v1216, %v1489
        %1491 = vmatmul.bf16.gmra.mxu0 %v1386
        %v1492 = vpop.f32.mrf.mxu0
        %v1493 = vadd.f32 %v1221, %v1492
        %v1494 = vpop.f32.mrf.mxu0
        %v1495 = vadd.f32 %v1226, %v1494
        %1496 = vmatmul.bf16.gmra.mxu0 %v1388
        %v1497 = vpop.f32.mrf.mxu0
        %v1498 = vadd.f32 %v1231, %v1497
        %v1499 = vpop.f32.mrf.mxu0
        %v1500 = vadd.f32 %v1236, %v1499
        %1501 = vmatmul.bf16.gmra.mxu0 %v1390
        %v1502 = vpop.f32.mrf.mxu0
        %v1503 = vadd.f32 %v1241, %v1502
        %v1504 = vpop.f32.mrf.mxu0
        %v1505 = vadd.f32 %v1246, %v1504
        %1506 = vmatmul.bf16.gmra.mxu0 %v1392
        %v1507 = vpop.f32.mrf.mxu0
        %v1508 = vadd.f32 %v1251, %v1507
        %v1509 = vpop.f32.mrf.mxu0
        %v1510 = vadd.f32 %v1256, %v1509
        %1511 = vmatmul.bf16.gmra.mxu0 %v1394
        %v1512 = vpop.f32.mrf.mxu0
        %v1513 = vadd.f32 %v1261, %v1512
        %v1514 = vpop.f32.mrf.mxu0
        %v1515 = vadd.f32 %v1266, %v1514
        %1516 = vdwg.mxu0
        %1517 = vmatpush.bf16.msra.mxu0 %v1042
        %1518 = vmatpush.bf16.msra.mxu0 %v1040
        %1519 = vmatpush.bf16.msra.mxu0 %v1038
        %1520 = vmatpush.bf16.msra.mxu0 %v1036
        %1521 = vmatpush.bf16.msra.mxu0 %v1034
        %1522 = vmatpush.bf16.msra.mxu0 %v1032
        %1523 = vmatpush.bf16.msra.mxu0 %v1030
        %1524 = vmatpush.bf16.msra.mxu0 %v1028
        %1525 = vmatmul.bf16.gmra.mxu0 %v1365
        %v1526 = vpop.f32.mrf.mxu0
        %v1527 = vadd.f32 %v1438, %v1526
        %v1528 = vpop.f32.mrf.mxu0
        %v1529 = vadd.f32 %v1440, %v1528
        %1530 = vmatmul.bf16.gmra.mxu0 %v1367
        %v1531 = vpop.f32.mrf.mxu0
        %v1532 = vadd.f32 %v1443, %v1531
        %v1533 = vpop.f32.mrf.mxu0
        %v1534 = vadd.f32 %v1445, %v1533
        %1535 = vmatmul.bf16.gmra.mxu0 %v1369
        %v1536 = vpop.f32.mrf.mxu0
        %v1537 = vadd.f32 %v1448, %v1536
        %v1538 = vpop.f32.mrf.mxu0
        %v1539 = vadd.f32 %v1450, %v1538
        %1540 = vmatmul.bf16.gmra.mxu0 %v1371
        %v1541 = vpop.f32.mrf.mxu0
        %v1542 = vadd.f32 %v1453, %v1541
        %v1543 = vpop.f32.mrf.mxu0
        %v1544 = vadd.f32 %v1455, %v1543
        %1545 = vmatmul.bf16.gmra.mxu0 %v1373
        %v1546 = vpop.f32.mrf.mxu0
        %v1547 = vadd.f32 %v1458, %v1546
        %v1548 = vpop.f32.mrf.mxu0
        %v1549 = vadd.f32 %v1460, %v1548
        %1550 = vmatmul.bf16.gmra.mxu0 %v1375
        %v1551 = vpop.f32.mrf.mxu0
        %v1552 = vadd.f32 %v1463, %v1551
        %v1553 = vpop.f32.mrf.mxu0
        %v1554 = vadd.f32 %v1465, %v1553
        %1555 = vmatmul.bf16.gmra.mxu0 %v1377
        %v1556 = vpop.f32.mrf.mxu0
        %v1557 = vadd.f32 %v1468, %v1556
        %v1558 = vpop.f32.mrf.mxu0
        %v1559 = vadd.f32 %v1470, %v1558
        %1560 = vmatmul.bf16.gmra.mxu0 %v1379
        %v1561 = vpop.f32.mrf.mxu0
        %v1562 = vadd.f32 %v1473, %v1561
        %v1563 = vpop.f32.mrf.mxu0
        %v1564 = vadd.f32 %v1475, %v1563
        %1565 = vmatmul.bf16.gmra.mxu0 %v1381
        %v1566 = vpop.f32.mrf.mxu0
        %v1567 = vadd.f32 %v1478, %v1566
        %v1568 = vpop.f32.mrf.mxu0
        %v1569 = vadd.f32 %v1480, %v1568
        %1570 = vmatmul.bf16.gmra.mxu0 %v1383
        %v1571 = vpop.f32.mrf.mxu0
        %v1572 = vadd.f32 %v1483, %v1571
        %v1573 = vpop.f32.mrf.mxu0
        %v1574 = vadd.f32 %v1485, %v1573
        %1575 = vmatmul.bf16.gmra.mxu0 %v1385
        %v1576 = vpop.f32.mrf.mxu0
        %v1577 = vadd.f32 %v1488, %v1576
        %v1578 = vpop.f32.mrf.mxu0
        %v1579 = vadd.f32 %v1490, %v1578
        %1580 = vmatmul.bf16.gmra.mxu0 %v1387
        %v1581 = vpop.f32.mrf.mxu0
        %v1582 = vadd.f32 %v1493, %v1581
        %v1583 = vpop.f32.mrf.mxu0
        %v1584 = vadd.f32 %v1495, %v1583
        %1585 = vmatmul.bf16.gmra.mxu0 %v1389
        %v1586 = vpop.f32.mrf.mxu0
        %v1587 = vadd.f32 %v1498, %v1586
        %v1588 = vpop.f32.mrf.mxu0
        %v1589 = vadd.f32 %v1500, %v1588
        %1590 = vmatmul.bf16.gmra.mxu0 %v1391
        %v1591 = vpop.f32.mrf.mxu0
        %v1592 = vadd.f32 %v1503, %v1591
        %v1593 = vpop.f32.mrf.mxu0
        %v1594 = vadd.f32 %v1505, %v1593
        %1595 = vmatmul.bf16.gmra.mxu0 %v1393
        %v1596 = vpop.f32.mrf.mxu0
        %v1597 = vadd.f32 %v1508, %v1596
        %v1598 = vpop.f32.mrf.mxu0
        %v1599 = vadd.f32 %v1510, %v1598
        %1600 = vmatmul.bf16.gmra.mxu0 %v1395
        %v1601 = vpop.f32.mrf.mxu0
        %v1602 = vadd.f32 %v1513, %v1601
        %v1603 = vpop.f32.mrf.mxu0
        %v1604 = vadd.f32 %v1515, %v1603
        %1605 = vdwg.mxu0
        %1606 = vmatpush.bf16.msra.mxu0 %v1027
        %1607 = vmatpush.bf16.msra.mxu0 %v1025
        %1608 = vmatpush.bf16.msra.mxu0 %v1023
        %1609 = vmatpush.bf16.msra.mxu0 %v1021
        %1610 = vmatpush.bf16.msra.mxu0 %v1019
        %1611 = vmatpush.bf16.msra.mxu0 %v1017
        %1612 = vmatpush.bf16.msra.mxu0 %v1015
        %1613 = vmatpush.bf16.msra.mxu0 %v1013
        %1614 = vmatmul.bf16.gmra.mxu0 %v1364
        %v1615 = vpop.f32.mrf.mxu0
        %v1616 = vadd.f32 %v1111, %v1615
        %v1617 = vpop.f32.mrf.mxu0
        %v1618 = vadd.f32 %v1116, %v1617
        %1619 = vmatmul.bf16.gmra.mxu0 %v1366
        %v1620 = vpop.f32.mrf.mxu0
        %v1621 = vadd.f32 %v1121, %v1620
        %v1622 = vpop.f32.mrf.mxu0
        %v1623 = vadd.f32 %v1126, %v1622
        %1624 = vmatmul.bf16.gmra.mxu0 %v1368
        %v1625 = vpop.f32.mrf.mxu0
        %v1626 = vadd.f32 %v1131, %v1625
        %v1627 = vpop.f32.mrf.mxu0
        %v1628 = vadd.f32 %v1136, %v1627
        %1629 = vmatmul.bf16.gmra.mxu0 %v1370
        %v1630 = vpop.f32.mrf.mxu0
        %v1631 = vadd.f32 %v1141, %v1630
        %v1632 = vpop.f32.mrf.mxu0
        %v1633 = vadd.f32 %v1146, %v1632
        %1634 = vmatmul.bf16.gmra.mxu0 %v1372
        %v1635 = vpop.f32.mrf.mxu0
        %v1636 = vadd.f32 %v1151, %v1635
        %v1637 = vpop.f32.mrf.mxu0
        %v1638 = vadd.f32 %v1156, %v1637
        %1639 = vmatmul.bf16.gmra.mxu0 %v1374
        %v1640 = vpop.f32.mrf.mxu0
        %v1641 = vadd.f32 %v1161, %v1640
        %v1642 = vpop.f32.mrf.mxu0
        %v1643 = vadd.f32 %v1166, %v1642
        %1644 = vmatmul.bf16.gmra.mxu0 %v1376
        %v1645 = vpop.f32.mrf.mxu0
        %v1646 = vadd.f32 %v1171, %v1645
        %v1647 = vpop.f32.mrf.mxu0
        %v1648 = vadd.f32 %v1176, %v1647
        %1649 = vmatmul.bf16.gmra.mxu0 %v1378
        %v1650 = vpop.f32.mrf.mxu0
        %v1651 = vadd.f32 %v1181, %v1650
        %v1652 = vpop.f32.mrf.mxu0
        %v1653 = vadd.f32 %v1186, %v1652
        %1654 = vmatmul.bf16.gmra.mxu0 %v1380
        %v1655 = vpop.f32.mrf.mxu0
        %v1656 = vadd.f32 %v1191, %v1655
        %v1657 = vpop.f32.mrf.mxu0
        %v1658 = vadd.f32 %v1196, %v1657
        %1659 = vmatmul.bf16.gmra.mxu0 %v1382
        %v1660 = vpop.f32.mrf.mxu0
        %v1661 = vadd.f32 %v1201, %v1660
        %v1662 = vpop.f32.mrf.mxu0
        %v1663 = vadd.f32 %v1206, %v1662
        %1664 = vmatmul.bf16.gmra.mxu0 %v1384
        %v1665 = vpop.f32.mrf.mxu0
        %v1666 = vadd.f32 %v1211, %v1665
        %v1667 = vpop.f32.mrf.mxu0
        %v1668 = vadd.f32 %v1216, %v1667
        %1669 = vmatmul.bf16.gmra.mxu0 %v1386
        %v1670 = vpop.f32.mrf.mxu0
        %v1671 = vadd.f32 %v1221, %v1670
        %v1672 = vpop.f32.mrf.mxu0
        %v1673 = vadd.f32 %v1226, %v1672
        %1674 = vmatmul.bf16.gmra.mxu0 %v1388
        %v1675 = vpop.f32.mrf.mxu0
        %v1676 = vadd.f32 %v1231, %v1675
        %v1677 = vpop.f32.mrf.mxu0
        %v1678 = vadd.f32 %v1236, %v1677
        %1679 = vmatmul.bf16.gmra.mxu0 %v1390
        %v1680 = vpop.f32.mrf.mxu0
        %v1681 = vadd.f32 %v1241, %v1680
        %v1682 = vpop.f32.mrf.mxu0
        %v1683 = vadd.f32 %v1246, %v1682
        %1684 = vmatmul.bf16.gmra.mxu0 %v1392
        %v1685 = vpop.f32.mrf.mxu0
        %v1686 = vadd.f32 %v1251, %v1685
        %v1687 = vpop.f32.mrf.mxu0
        %v1688 = vadd.f32 %v1256, %v1687
        %1689 = vmatmul.bf16.gmra.mxu0 %v1394
        %v1690 = vpop.f32.mrf.mxu0
        %v1691 = vadd.f32 %v1261, %v1690
        %v1692 = vpop.f32.mrf.mxu0
        %v1693 = vadd.f32 %v1266, %v1692
        %1694 = vdwg.mxu0
        %1695 = vmatpush.bf16.msra.mxu0 %v1043
        %1696 = vmatpush.bf16.msra.mxu0 %v1041
        %1697 = vmatpush.bf16.msra.mxu0 %v1039
        %1698 = vmatpush.bf16.msra.mxu0 %v1037
        %1699 = vmatpush.bf16.msra.mxu0 %v1035
        %1700 = vmatpush.bf16.msra.mxu0 %v1033
        %1701 = vmatpush.bf16.msra.mxu0 %v1031
        %1702 = vmatpush.bf16.msra.mxu0 %v1029
        %1703 = vmatmul.bf16.gmra.mxu0 %v1365
        %v1704 = vpop.f32.mrf.mxu0
        %v1705 = vadd.f32 %v1616, %v1704
        %v1706 = vpop.f32.mrf.mxu0
        %v1707 = vadd.f32 %v1618, %v1706
        %1708 = vmatmul.bf16.gmra.mxu0 %v1367
        %v1709 = vpop.f32.mrf.mxu0
        %v1710 = vadd.f32 %v1621, %v1709
        %v1711 = vpop.f32.mrf.mxu0
        %v1712 = vadd.f32 %v1623, %v1711
        %1713 = vmatmul.bf16.gmra.mxu0 %v1369
        %v1714 = vpop.f32.mrf.mxu0
        %v1715 = vadd.f32 %v1626, %v1714
        %v1716 = vpop.f32.mrf.mxu0
        %v1717 = vadd.f32 %v1628, %v1716
        %1718 = vmatmul.bf16.gmra.mxu0 %v1371
        %v1719 = vpop.f32.mrf.mxu0
        %v1720 = vadd.f32 %v1631, %v1719
        %v1721 = vpop.f32.mrf.mxu0
        %v1722 = vadd.f32 %v1633, %v1721
        %1723 = vmatmul.bf16.gmra.mxu0 %v1373
        %v1724 = vpop.f32.mrf.mxu0
        %v1725 = vadd.f32 %v1636, %v1724
        %v1726 = vpop.f32.mrf.mxu0
        %v1727 = vadd.f32 %v1638, %v1726
        %1728 = vmatmul.bf16.gmra.mxu0 %v1375
        %v1729 = vpop.f32.mrf.mxu0
        %v1730 = vadd.f32 %v1641, %v1729
        %v1731 = vpop.f32.mrf.mxu0
        %v1732 = vadd.f32 %v1643, %v1731
        %1733 = vmatmul.bf16.gmra.mxu0 %v1377
        %v1734 = vpop.f32.mrf.mxu0
        %v1735 = vadd.f32 %v1646, %v1734
        %v1736 = vpop.f32.mrf.mxu0
        %v1737 = vadd.f32 %v1648, %v1736
        %1738 = vmatmul.bf16.gmra.mxu0 %v1379
        %v1739 = vpop.f32.mrf.mxu0
        %v1740 = vadd.f32 %v1651, %v1739
        %v1741 = vpop.f32.mrf.mxu0
        %v1742 = vadd.f32 %v1653, %v1741
        %1743 = vmatmul.bf16.gmra.mxu0 %v1381
        %v1744 = vpop.f32.mrf.mxu0
        %v1745 = vadd.f32 %v1656, %v1744
        %v1746 = vpop.f32.mrf.mxu0
        %v1747 = vadd.f32 %v1658, %v1746
        %1748 = vmatmul.bf16.gmra.mxu0 %v1383
        %v1749 = vpop.f32.mrf.mxu0
        %v1750 = vadd.f32 %v1661, %v1749
        %v1751 = vpop.f32.mrf.mxu0
        %v1752 = vadd.f32 %v1663, %v1751
        %1753 = vmatmul.bf16.gmra.mxu0 %v1385
        %v1754 = vpop.f32.mrf.mxu0
        %v1755 = vadd.f32 %v1666, %v1754
        %v1756 = vpop.f32.mrf.mxu0
        %v1757 = vadd.f32 %v1668, %v1756
        %1758 = vmatmul.bf16.gmra.mxu0 %v1387
        %v1759 = vpop.f32.mrf.mxu0
        %v1760 = vadd.f32 %v1671, %v1759
        %v1761 = vpop.f32.mrf.mxu0
        %v1762 = vadd.f32 %v1673, %v1761
        %1763 = vmatmul.bf16.gmra.mxu0 %v1389
        %v1764 = vpop.f32.mrf.mxu0
        %v1765 = vadd.f32 %v1676, %v1764
        %v1766 = vpop.f32.mrf.mxu0
        %v1767 = vadd.f32 %v1678, %v1766
        %1768 = vmatmul.bf16.gmra.mxu0 %v1391
        %v1769 = vpop.f32.mrf.mxu0
        %v1770 = vadd.f32 %v1681, %v1769
        %v1771 = vpop.f32.mrf.mxu0
        %v1772 = vadd.f32 %v1683, %v1771
        %1773 = vmatmul.bf16.gmra.mxu0 %v1393
        %v1774 = vpop.f32.mrf.mxu0
        %v1775 = vadd.f32 %v1686, %v1774
        %v1776 = vpop.f32.mrf.mxu0
        %v1777 = vadd.f32 %v1688, %v1776
        %1778 = vmatmul.bf16.gmra.mxu0 %v1395
        %v1779 = vpop.f32.mrf.mxu0
        %v1780 = vadd.f32 %v1691, %v1779
        %v1781 = vpop.f32.mrf.mxu0
        %v1782 = vadd.f32 %v1693, %v1781
        %1783 = vdwg.mxu0
        %v1784 = vmul.f32 %v1527, 0.01
        %v1785 = vmul.f32 %v1705, 0.01
        %v1786 = vmul.f32 %v1529, 0.01
        %v1787 = vmul.f32 %v1707, 0.01
        %v1788 = vmul.f32 %v1532, 0.01
        %v1789 = vmul.f32 %v1710, 0.01
        %v1790 = vmul.f32 %v1534, 0.01
        %v1791 = vmul.f32 %v1712, 0.01
        %v1792 = vmul.f32 %v1537, 0.01
        %v1793 = vmul.f32 %v1715, 0.01
        %v1794 = vmul.f32 %v1539, 0.01
        %v1795 = vmul.f32 %v1717, 0.01
        %v1796 = vmul.f32 %v1542, 0.01
        %v1797 = vmul.f32 %v1720, 0.01
        %v1798 = vmul.f32 %v1544, 0.01
        %v1799 = vmul.f32 %v1722, 0.01
        %v1800 = vmul.f32 %v1547, 0.01
        %v1801 = vmul.f32 %v1725, 0.01
        %v1802 = vmul.f32 %v1549, 0.01
        %v1803 = vmul.f32 %v1727, 0.01
        %v1804 = vmul.f32 %v1552, 0.01
        %v1805 = vmul.f32 %v1730, 0.01
        %v1806 = vmul.f32 %v1554, 0.01
        %v1807 = vmul.f32 %v1732, 0.01
        %v1808 = vmul.f32 %v1557, 0.01
        %v1809 = vmul.f32 %v1735, 0.01
        %v1810 = vmul.f32 %v1559, 0.01
        %v1811 = vmul.f32 %v1737, 0.01
        %v1812 = vmul.f32 %v1562, 0.01
        %v1813 = vmul.f32 %v1740, 0.01
        %v1814 = vmul.f32 %v1564, 0.01
        %v1815 = vmul.f32 %v1742, 0.01
        %v1816 = vmul.f32 %v1567, 0.01
        %v1817 = vmul.f32 %v1745, 0.01
        %v1818 = vmul.f32 %v1569, 0.01
        %v1819 = vmul.f32 %v1747, 0.01
        %v1820 = vmul.f32 %v1572, 0.01
        %v1821 = vmul.f32 %v1750, 0.01
        %v1822 = vmul.f32 %v1574, 0.01
        %v1823 = vmul.f32 %v1752, 0.01
        %v1824 = vmul.f32 %v1577, 0.01
        %v1825 = vmul.f32 %v1755, 0.01
        %v1826 = vmul.f32 %v1579, 0.01
        %v1827 = vmul.f32 %v1757, 0.01
        %v1828 = vmul.f32 %v1582, 0.01
        %v1829 = vmul.f32 %v1760, 0.01
        %v1830 = vmul.f32 %v1584, 0.01
        %v1831 = vmul.f32 %v1762, 0.01
        %v1832 = vmul.f32 %v1587, 0.01
        %v1833 = vmul.f32 %v1765, 0.01
        %v1834 = vmul.f32 %v1589, 0.01
        %v1835 = vmul.f32 %v1767, 0.01
        %v1836 = vmul.f32 %v1592, 0.01
        %v1837 = vmul.f32 %v1770, 0.01
        %v1838 = vmul.f32 %v1594, 0.01
        %v1839 = vmul.f32 %v1772, 0.01
        %v1840 = vmul.f32 %v1597, 0.01
        %v1841 = vmul.f32 %v1775, 0.01
        %v1842 = vmul.f32 %v1599, 0.01
        %v1843 = vmul.f32 %v1777, 0.01
        %v1844 = vmul.f32 %v1602, 0.01
        %v1845 = vmul.f32 %v1780, 0.01
        %v1846 = vmul.f32 %v1604, 0.01
        %v1847 = vmul.f32 %v1782, 0.01
        %v1848 = vmax.f32 %v1527, %v1784
        %v1849 = vmax.f32 %v1705, %v1785
        %v1850 = vmax.f32 %v1529, %v1786
        %v1851 = vmax.f32 %v1707, %v1787
        %v1852 = vmax.f32 %v1532, %v1788
        %v1853 = vmax.f32 %v1710, %v1789
        %v1854 = vmax.f32 %v1534, %v1790
        %v1855 = vmax.f32 %v1712, %v1791
        %v1856 = vmax.f32 %v1537, %v1792
        %v1857 = vmax.f32 %v1715, %v1793
        %v1858 = vmax.f32 %v1539, %v1794
        %v1859 = vmax.f32 %v1717, %v1795
        %v1860 = vmax.f32 %v1542, %v1796
        %v1861 = vmax.f32 %v1720, %v1797
        %v1862 = vmax.f32 %v1544, %v1798
        %v1863 = vmax.f32 %v1722, %v1799
        %v1864 = vmax.f32 %v1547, %v1800
        %v1865 = vmax.f32 %v1725, %v1801
        %v1866 = vmax.f32 %v1549, %v1802
        %v1867 = vmax.f32 %v1727, %v1803
        %v1868 = vmax.f32 %v1552, %v1804
        %v1869 = vmax.f32 %v1730, %v1805
        %v1870 = vmax.f32 %v1554, %v1806
        %v1871 = vmax.f32 %v1732, %v1807
        %v1872 = vmax.f32 %v1557, %v1808
        %v1873 = vmax.f32 %v1735, %v1809
        %v1874 = vmax.f32 %v1559, %v1810
        %v1875 = vmax.f32 %v1737, %v1811
        %v1876 = vmax.f32 %v1562, %v1812
        %v1877 = vmax.f32 %v1740, %v1813
        %v1878 = vmax.f32 %v1564, %v1814
        %v1879 = vmax.f32 %v1742, %v1815
        %v1880 = vmax.f32 %v1567, %v1816
        %v1881 = vmax.f32 %v1745, %v1817
        %v1882 = vmax.f32 %v1569, %v1818
        %v1883 = vmax.f32 %v1747, %v1819
        %v1884 = vmax.f32 %v1572, %v1820
        %v1885 = vmax.f32 %v1750, %v1821
        %v1886 = vmax.f32 %v1574, %v1822
        %v1887 = vmax.f32 %v1752, %v1823
        %v1888 = vmax.f32 %v1577, %v1824
        %v1889 = vmax.f32 %v1755, %v1825
        %v1890 = vmax.f32 %v1579, %v1826
        %v1891 = vmax.f32 %v1757, %v1827
        %v1892 = vmax.f32 %v1582, %v1828
        %v1893 = vmax.f32 %v1760, %v1829
        %v1894 = vmax.f32 %v1584, %v1830
        %v1895 = vmax.f32 %v1762, %v1831
        %v1896 = vmax.f32 %v1587, %v1832
        %v1897 = vmax.f32 %v1765, %v1833
        %v1898 = vmax.f32 %v1589, %v1834
        %v1899 = vmax.f32 %v1767, %v1835
        %v1900 = vmax.f32 %v1592, %v1836
        %v1901 = vmax.f32 %v1770, %v1837
        %v1902 = vmax.f32 %v1594, %v1838
        %v1903 = vmax.f32 %v1772, %v1839
        %v1904 = vmax.f32 %v1597, %v1840
        %v1905 = vmax.f32 %v1775, %v1841
        %v1906 = vmax.f32 %v1599, %v1842
        %v1907 = vmax.f32 %v1777, %v1843
        %v1908 = vmax.f32 %v1602, %v1844
        %v1909 = vmax.f32 %v1780, %v1845
        %v1910 = vmax.f32 %v1604, %v1846
        %v1911 = vmax.f32 %v1782, %v1847
        %v1912 = vpack.c.bf16 %v1850, %v1848
        %v1913 = vpack.c.bf16 %v1851, %v1849
        %v1914 = vpack.c.bf16 %v1854, %v1852
        %v1915 = vpack.c.bf16 %v1855, %v1853
        %v1916 = vpack.c.bf16 %v1858, %v1856
        %v1917 = vpack.c.bf16 %v1859, %v1857
        %v1918 = vpack.c.bf16 %v1862, %v1860
        %v1919 = vpack.c.bf16 %v1863, %v1861
        %v1920 = vpack.c.bf16 %v1866, %v1864
        %v1921 = vpack.c.bf16 %v1867, %v1865
        %v1922 = vpack.c.bf16 %v1870, %v1868
        %v1923 = vpack.c.bf16 %v1871, %v1869
        %v1924 = vpack.c.bf16 %v1874, %v1872
        %v1925 = vpack.c.bf16 %v1875, %v1873
        %v1926 = vpack.c.bf16 %v1878, %v1876
        %v1927 = vpack.c.bf16 %v1879, %v1877
        %v1928 = vpack.c.bf16 %v1882, %v1880
        %v1929 = vpack.c.bf16 %v1883, %v1881
        %v1930 = vpack.c.bf16 %v1886, %v1884
        %v1931 = vpack.c.bf16 %v1887, %v1885
        %v1932 = vpack.c.bf16 %v1890, %v1888
        %v1933 = vpack.c.bf16 %v1891, %v1889
        %v1934 = vpack.c.bf16 %v1894, %v1892
        %v1935 = vpack.c.bf16 %v1895, %v1893
        %v1936 = vpack.c.bf16 %v1898, %v1896
        %v1937 = vpack.c.bf16 %v1899, %v1897
        %v1938 = vpack.c.bf16 %v1902, %v1900
        %v1939 = vpack.c.bf16 %v1903, %v1901
        %v1940 = vpack.c.bf16 %v1906, %v1904
        %v1941 = vpack.c.bf16 %v1907, %v1905
        %v1942 = vpack.c.bf16 %v1910, %v1908
        %v1943 = vpack.c.bf16 %v1911, %v1909
        %v1944 = vld [vmem:[%s5] sm:$0xff]
        %v1945 = vld [vmem:[%s5 + $0x8] sm:$0xff]
        %v1946 = vld [vmem:[%s5 + $0x10] sm:$0xff]
        %v1947 = vld [vmem:[%s5 + $0x18] sm:$0xff]
        %v1948 = vld [vmem:[%s5 + $0x20] sm:$0xff]
        %v1949 = vld [vmem:[%s5 + $0x28] sm:$0xff]
        %v1950 = vld [vmem:[%s5 + $0x30] sm:$0xff]
        %v1951 = vld [vmem:[%s5 + $0x38] sm:$0xff]
        %v1952 = vld [vmem:[%s5 + $0x40] sm:$0xff]
        %v1953 = vld [vmem:[%s5 + $0x48] sm:$0xff]
        %v1954 = vld [vmem:[%s5 + $0x50] sm:$0xff]
        %v1955 = vld [vmem:[%s5 + $0x58] sm:$0xff]
        %v1956 = vld [vmem:[%s5 + $0x60] sm:$0xff]
        %v1957 = vld [vmem:[%s5 + $0x68] sm:$0xff]
        %v1958 = vld [vmem:[%s5 + $0x70] sm:$0xff]
        %v1959 = vld [vmem:[%s5 + $0x78] sm:$0xff]
        %v1960 = vld [vmem:[%s5 + $0x80] sm:$0xff]
        %v1961 = vld [vmem:[%s5 + $0x88] sm:$0xff]
        %v1962 = vld [vmem:[%s5 + $0x90] sm:$0xff]
        %v1963 = vld [vmem:[%s5 + $0x98] sm:$0xff]
        %v1964 = vld [vmem:[%s5 + $0xa0] sm:$0xff]
        %v1965 = vld [vmem:[%s5 + $0xa8] sm:$0xff]
        %v1966 = vld [vmem:[%s5 + $0xb0] sm:$0xff]
        %v1967 = vld [vmem:[%s5 + $0xb8] sm:$0xff]
        %v1968 = vld [vmem:[%s5 + $0xc0] sm:$0xff]
        %v1969 = vld [vmem:[%s5 + $0xc8] sm:$0xff]
        %v1970 = vld [vmem:[%s5 + $0xd0] sm:$0xff]
        %v1971 = vld [vmem:[%s5 + $0xd8] sm:$0xff]
        %v1972 = vld [vmem:[%s5 + $0xe0] sm:$0xff]
        %v1973 = vld [vmem:[%s5 + $0xe8] sm:$0xff]
        %v1974 = vld [vmem:[%s5 + $0xf0] sm:$0xff]
        %v1975 = vld [vmem:[%s5 + $0xf8] sm:$0xff]
        %v1976 = vld [vmem:[%s6] sm:$0xff]
        %v1977 = vld [vmem:[%s6 + $0x8] sm:$0xff]
        %v1978 = vld [vmem:[%s6 + $0x10] sm:$0xff]
        %v1979 = vld [vmem:[%s6 + $0x18] sm:$0xff]
        %v1980 = vld [vmem:[%s6 + $0x20] sm:$0xff]
        %v1981 = vld [vmem:[%s6 + $0x28] sm:$0xff]
        %v1982 = vld [vmem:[%s6 + $0x30] sm:$0xff]
        %v1983 = vld [vmem:[%s6 + $0x38] sm:$0xff]
        %v1984 = vld [vmem:[%s6 + $0x40] sm:$0xff]
        %v1985 = vld [vmem:[%s6 + $0x48] sm:$0xff]
        %v1986 = vld [vmem:[%s6 + $0x50] sm:$0xff]
        %v1987 = vld [vmem:[%s6 + $0x58] sm:$0xff]
        %v1988 = vld [vmem:[%s6 + $0x60] sm:$0xff]
        %v1989 = vld [vmem:[%s6 + $0x68] sm:$0xff]
        %v1990 = vld [vmem:[%s6 + $0x70] sm:$0xff]
        %v1991 = vld [vmem:[%s6 + $0x78] sm:$0xff]
        %v1992 = vld [vmem:[%s6 + $0x80] sm:$0xff]
        %v1993 = vld [vmem:[%s6 + $0x88] sm:$0xff]
        %v1994 = vld [vmem:[%s6 + $0x90] sm:$0xff]
        %v1995 = vld [vmem:[%s6 + $0x98] sm:$0xff]
        %v1996 = vld [vmem:[%s6 + $0xa0] sm:$0xff]
        %v1997 = vld [vmem:[%s6 + $0xa8] sm:$0xff]
        %v1998 = vld [vmem:[%s6 + $0xb0] sm:$0xff]
        %v1999 = vld [vmem:[%s6 + $0xb8] sm:$0xff]
        %v2000 = vld [vmem:[%s6 + $0xc0] sm:$0xff]
        %v2001 = vld [vmem:[%s6 + $0xc8] sm:$0xff]
        %v2002 = vld [vmem:[%s6 + $0xd0] sm:$0xff]
        %v2003 = vld [vmem:[%s6 + $0xd8] sm:$0xff]
        %v2004 = vld [vmem:[%s6 + $0xe0] sm:$0xff]
        %v2005 = vld [vmem:[%s6 + $0xe8] sm:$0xff]
        %v2006 = vld [vmem:[%s6 + $0xf0] sm:$0xff]
        %v2007 = vld [vmem:[%s6 + $0xf8] sm:$0xff]
        %2009 = vset.pattern.permute.xlu0 0
        %2010 = vperm.xlu0 %2009, %v1976
        %v2011 = vpop.permute.xlu0 %2010
        %2014 = vset.pattern.permute.xlu0 0
        %2015 = vperm.xlu0 %2014, %v1977
        %v2016 = vpop.permute.xlu0 %2015
        %2019 = vset.pattern.permute.xlu0 0
        %2020 = vperm.xlu0 %2019, %v1978
        %v2021 = vpop.permute.xlu0 %2020
        %2024 = vset.pattern.permute.xlu0 0
        %2025 = vperm.xlu0 %2024, %v1979
        %v2026 = vpop.permute.xlu0 %2025
        %2029 = vset.pattern.permute.xlu0 0
        %2030 = vperm.xlu0 %2029, %v1980
        %v2031 = vpop.permute.xlu0 %2030
        %2034 = vset.pattern.permute.xlu0 0
        %2035 = vperm.xlu0 %2034, %v1981
        %v2036 = vpop.permute.xlu0 %2035
        %2039 = vset.pattern.permute.xlu0 0
        %2040 = vperm.xlu0 %2039, %v1982
        %v2041 = vpop.permute.xlu0 %2040
        %2044 = vset.pattern.permute.xlu0 0
        %2045 = vperm.xlu0 %2044, %v1983
        %v2046 = vpop.permute.xlu0 %2045
        %2049 = vset.pattern.permute.xlu0 0
        %2050 = vperm.xlu0 %2049, %v1984
        %v2051 = vpop.permute.xlu0 %2050
        %2054 = vset.pattern.permute.xlu0 0
        %2055 = vperm.xlu0 %2054, %v1985
        %v2056 = vpop.permute.xlu0 %2055
        %2059 = vset.pattern.permute.xlu0 0
        %2060 = vperm.xlu0 %2059, %v1986
        %v2061 = vpop.permute.xlu0 %2060
        %2064 = vset.pattern.permute.xlu0 0
        %2065 = vperm.xlu0 %2064, %v1987
        %v2066 = vpop.permute.xlu0 %2065
        %2069 = vset.pattern.permute.xlu0 0
        %2070 = vperm.xlu0 %2069, %v1988
        %v2071 = vpop.permute.xlu0 %2070
        %2074 = vset.pattern.permute.xlu0 0
        %2075 = vperm.xlu0 %2074, %v1989
        %v2076 = vpop.permute.xlu0 %2075
        %2079 = vset.pattern.permute.xlu0 0
        %2080 = vperm.xlu0 %2079, %v1990
        %v2081 = vpop.permute.xlu0 %2080
        %2084 = vset.pattern.permute.xlu0 0
        %2085 = vperm.xlu0 %2084, %v1991
        %v2086 = vpop.permute.xlu0 %2085
        %2089 = vset.pattern.permute.xlu0 0
        %2090 = vperm.xlu0 %2089, %v1992
        %v2091 = vpop.permute.xlu0 %2090
        %2094 = vset.pattern.permute.xlu0 0
        %2095 = vperm.xlu0 %2094, %v1993
        %v2096 = vpop.permute.xlu0 %2095
        %2099 = vset.pattern.permute.xlu0 0
        %2100 = vperm.xlu0 %2099, %v1994
        %v2101 = vpop.permute.xlu0 %2100
        %2104 = vset.pattern.permute.xlu0 0
        %2105 = vperm.xlu0 %2104, %v1995
        %v2106 = vpop.permute.xlu0 %2105
        %2109 = vset.pattern.permute.xlu0 0
        %2110 = vperm.xlu0 %2109, %v1996
        %v2111 = vpop.permute.xlu0 %2110
        %2114 = vset.pattern.permute.xlu0 0
        %2115 = vperm.xlu0 %2114, %v1997
        %v2116 = vpop.permute.xlu0 %2115
        %2119 = vset.pattern.permute.xlu0 0
        %2120 = vperm.xlu0 %2119, %v1998
        %v2121 = vpop.permute.xlu0 %2120
        %2124 = vset.pattern.permute.xlu0 0
        %2125 = vperm.xlu0 %2124, %v1999
        %v2126 = vpop.permute.xlu0 %2125
        %2129 = vset.pattern.permute.xlu0 0
        %2130 = vperm.xlu0 %2129, %v2000
        %v2131 = vpop.permute.xlu0 %2130
        %2134 = vset.pattern.permute.xlu0 0
        %2135 = vperm.xlu0 %2134, %v2001
        %v2136 = vpop.permute.xlu0 %2135
        %2139 = vset.pattern.permute.xlu0 0
        %2140 = vperm.xlu0 %2139, %v2002
        %v2141 = vpop.permute.xlu0 %2140
        %2144 = vset.pattern.permute.xlu0 0
        %2145 = vperm.xlu0 %2144, %v2003
        %v2146 = vpop.permute.xlu0 %2145
        %2149 = vset.pattern.permute.xlu0 0
        %2150 = vperm.xlu0 %2149, %v2004
        %v2151 = vpop.permute.xlu0 %2150
        %2154 = vset.pattern.permute.xlu0 0
        %2155 = vperm.xlu0 %2154, %v2005
        %v2156 = vpop.permute.xlu0 %2155
        %2159 = vset.pattern.permute.xlu0 0
        %2160 = vperm.xlu0 %2159, %v2006
        %v2161 = vpop.permute.xlu0 %2160
        %2164 = vset.pattern.permute.xlu0 0
        %2165 = vperm.xlu0 %2164, %v2007
        %v2166 = vpop.permute.xlu0 %2165
        %v2200 = vunpack.c.l.b16 %v1944
        %v2201 = vunpack.c.h.b16 %v1944
        %v2202 = vunpack.c.l.b16 %v1945
        %v2203 = vunpack.c.h.b16 %v1945
        %v2204 = vunpack.c.l.b16 %v1946
        %v2205 = vunpack.c.h.b16 %v1946
        %v2206 = vunpack.c.l.b16 %v1947
        %v2207 = vunpack.c.h.b16 %v1947
        %v2208 = vunpack.c.l.b16 %v1948
        %v2209 = vunpack.c.h.b16 %v1948
        %v2210 = vunpack.c.l.b16 %v1949
        %v2211 = vunpack.c.h.b16 %v1949
        %v2212 = vunpack.c.l.b16 %v1950
        %v2213 = vunpack.c.h.b16 %v1950
        %v2214 = vunpack.c.l.b16 %v1951
        %v2215 = vunpack.c.h.b16 %v1951
        %v2216 = vunpack.c.l.b16 %v1952
        %v2217 = vunpack.c.h.b16 %v1952
        %v2218 = vunpack.c.l.b16 %v1953
        %v2219 = vunpack.c.h.b16 %v1953
        %v2220 = vunpack.c.l.b16 %v1954
        %v2221 = vunpack.c.h.b16 %v1954
        %v2222 = vunpack.c.l.b16 %v1955
        %v2223 = vunpack.c.h.b16 %v1955
        %v2224 = vunpack.c.l.b16 %v1956
        %v2225 = vunpack.c.h.b16 %v1956
        %v2226 = vunpack.c.l.b16 %v1957
        %v2227 = vunpack.c.h.b16 %v1957
        %v2228 = vunpack.c.l.b16 %v1958
        %v2229 = vunpack.c.h.b16 %v1958
        %v2230 = vunpack.c.l.b16 %v1959
        %v2231 = vunpack.c.h.b16 %v1959
        %v2232 = vunpack.c.l.b16 %v1960
        %v2233 = vunpack.c.h.b16 %v1960
        %v2234 = vunpack.c.l.b16 %v1961
        %v2235 = vunpack.c.h.b16 %v1961
        %v2236 = vunpack.c.l.b16 %v1962
        %v2237 = vunpack.c.h.b16 %v1962
        %v2238 = vunpack.c.l.b16 %v1963
        %v2239 = vunpack.c.h.b16 %v1963
        %v2240 = vunpack.c.l.b16 %v1964
        %v2241 = vunpack.c.h.b16 %v1964
        %v2242 = vunpack.c.l.b16 %v1965
        %v2243 = vunpack.c.h.b16 %v1965
        %v2244 = vunpack.c.l.b16 %v1966
        %v2245 = vunpack.c.h.b16 %v1966
        %v2246 = vunpack.c.l.b16 %v1967
        %v2247 = vunpack.c.h.b16 %v1967
        %v2248 = vunpack.c.l.b16 %v1968
        %v2249 = vunpack.c.h.b16 %v1968
        %v2250 = vunpack.c.l.b16 %v1969
        %v2251 = vunpack.c.h.b16 %v1969
        %v2252 = vunpack.c.l.b16 %v1970
        %v2253 = vunpack.c.h.b16 %v1970
        %v2254 = vunpack.c.l.b16 %v1971
        %v2255 = vunpack.c.h.b16 %v1971
        %v2256 = vunpack.c.l.b16 %v1972
        %v2257 = vunpack.c.h.b16 %v1972
        %v2258 = vunpack.c.l.b16 %v1973
        %v2259 = vunpack.c.h.b16 %v1973
        %v2260 = vunpack.c.l.b16 %v1974
        %v2261 = vunpack.c.h.b16 %v1974
        %v2262 = vunpack.c.l.b16 %v1975
        %v2263 = vunpack.c.h.b16 %v1975
        %v2264 = vpack.c.b16 %v2202, %v2200
        %v2265 = vpack.c.b16 %v2203, %v2201
        %v2266 = vpack.c.b16 %v2206, %v2204
        %v2267 = vpack.c.b16 %v2207, %v2205
        %v2268 = vpack.c.b16 %v2210, %v2208
        %v2269 = vpack.c.b16 %v2211, %v2209
        %v2270 = vpack.c.b16 %v2214, %v2212
        %v2271 = vpack.c.b16 %v2215, %v2213
        %v2272 = vpack.c.b16 %v2218, %v2216
        %v2273 = vpack.c.b16 %v2219, %v2217
        %v2274 = vpack.c.b16 %v2222, %v2220
        %v2275 = vpack.c.b16 %v2223, %v2221
        %v2276 = vpack.c.b16 %v2226, %v2224
        %v2277 = vpack.c.b16 %v2227, %v2225
        %v2278 = vpack.c.b16 %v2230, %v2228
        %v2279 = vpack.c.b16 %v2231, %v2229
        %v2280 = vpack.c.b16 %v2234, %v2232
        %v2281 = vpack.c.b16 %v2235, %v2233
        %v2282 = vpack.c.b16 %v2238, %v2236
        %v2283 = vpack.c.b16 %v2239, %v2237
        %v2284 = vpack.c.b16 %v2242, %v2240
        %v2285 = vpack.c.b16 %v2243, %v2241
        %v2286 = vpack.c.b16 %v2246, %v2244
        %v2287 = vpack.c.b16 %v2247, %v2245
        %v2288 = vpack.c.b16 %v2250, %v2248
        %v2289 = vpack.c.b16 %v2251, %v2249
        %v2290 = vpack.c.b16 %v2254, %v2252
        %v2291 = vpack.c.b16 %v2255, %v2253
        %v2292 = vpack.c.b16 %v2258, %v2256
        %v2293 = vpack.c.b16 %v2259, %v2257
        %v2294 = vpack.c.b16 %v2262, %v2260
        %v2295 = vpack.c.b16 %v2263, %v2261
        %2328 = vmatpush.bf16.msra.mxu0 %v1926
        %2329 = vmatpush.bf16.msra.mxu0 %v1924
        %2330 = vmatpush.bf16.msra.mxu0 %v1922
        %2331 = vmatpush.bf16.msra.mxu0 %v1920
        %2332 = vmatpush.bf16.msra.mxu0 %v1918
        %2333 = vmatpush.bf16.msra.mxu0 %v1916
        %2334 = vmatpush.bf16.msra.mxu0 %v1914
        %2335 = vmatpush.bf16.msra.mxu0 %v1912
        %2336 = vmatmul.bf16.gmra.mxu0 %v2264
        %v2337 = vpop.f32.mrf.mxu0
        %v2338 = vadd.f32 %v2011, %v2337
        %v2339 = vpop.f32.mrf.mxu0
        %v2340 = vadd.f32 %v2016, %v2339
        %2341 = vmatmul.bf16.gmra.mxu0 %v2266
        %v2342 = vpop.f32.mrf.mxu0
        %v2343 = vadd.f32 %v2021, %v2342
        %v2344 = vpop.f32.mrf.mxu0
        %v2345 = vadd.f32 %v2026, %v2344
        %2346 = vmatmul.bf16.gmra.mxu0 %v2268
        %v2347 = vpop.f32.mrf.mxu0
        %v2348 = vadd.f32 %v2031, %v2347
        %v2349 = vpop.f32.mrf.mxu0
        %v2350 = vadd.f32 %v2036, %v2349
        %2351 = vmatmul.bf16.gmra.mxu0 %v2270
        %v2352 = vpop.f32.mrf.mxu0
        %v2353 = vadd.f32 %v2041, %v2352
        %v2354 = vpop.f32.mrf.mxu0
        %v2355 = vadd.f32 %v2046, %v2354
        %2356 = vmatmul.bf16.gmra.mxu0 %v2272
        %v2357 = vpop.f32.mrf.mxu0
        %v2358 = vadd.f32 %v2051, %v2357
        %v2359 = vpop.f32.mrf.mxu0
        %v2360 = vadd.f32 %v2056, %v2359
        %2361 = vmatmul.bf16.gmra.mxu0 %v2274
        %v2362 = vpop.f32.mrf.mxu0
        %v2363 = vadd.f32 %v2061, %v2362
        %v2364 = vpop.f32.mrf.mxu0
        %v2365 = vadd.f32 %v2066, %v2364
        %2366 = vmatmul.bf16.gmra.mxu0 %v2276
        %v2367 = vpop.f32.mrf.mxu0
        %v2368 = vadd.f32 %v2071, %v2367
        %v2369 = vpop.f32.mrf.mxu0
        %v2370 = vadd.f32 %v2076, %v2369
        %2371 = vmatmul.bf16.gmra.mxu0 %v2278
        %v2372 = vpop.f32.mrf.mxu0
        %v2373 = vadd.f32 %v2081, %v2372
        %v2374 = vpop.f32.mrf.mxu0
        %v2375 = vadd.f32 %v2086, %v2374
        %2376 = vmatmul.bf16.gmra.mxu0 %v2280
        %v2377 = vpop.f32.mrf.mxu0
        %v2378 = vadd.f32 %v2091, %v2377
        %v2379 = vpop.f32.mrf.mxu0
        %v2380 = vadd.f32 %v2096, %v2379
        %2381 = vmatmul.bf16.gmra.mxu0 %v2282
        %v2382 = vpop.f32.mrf.mxu0
        %v2383 = vadd.f32 %v2101, %v2382
        %v2384 = vpop.f32.mrf.mxu0
        %v2385 = vadd.f32 %v2106, %v2384
        %2386 = vmatmul.bf16.gmra.mxu0 %v2284
        %v2387 = vpop.f32.mrf.mxu0
        %v2388 = vadd.f32 %v2111, %v2387
        %v2389 = vpop.f32.mrf.mxu0
        %v2390 = vadd.f32 %v2116, %v2389
        %2391 = vmatmul.bf16.gmra.mxu0 %v2286
        %v2392 = vpop.f32.mrf.mxu0
        %v2393 = vadd.f32 %v2121, %v2392
        %v2394 = vpop.f32.mrf.mxu0
        %v2395 = vadd.f32 %v2126, %v2394
        %2396 = vmatmul.bf16.gmra.mxu0 %v2288
        %v2397 = vpop.f32.mrf.mxu0
        %v2398 = vadd.f32 %v2131, %v2397
        %v2399 = vpop.f32.mrf.mxu0
        %v2400 = vadd.f32 %v2136, %v2399
        %2401 = vmatmul.bf16.gmra.mxu0 %v2290
        %v2402 = vpop.f32.mrf.mxu0
        %v2403 = vadd.f32 %v2141, %v2402
        %v2404 = vpop.f32.mrf.mxu0
        %v2405 = vadd.f32 %v2146, %v2404
        %2406 = vmatmul.bf16.gmra.mxu0 %v2292
        %v2407 = vpop.f32.mrf.mxu0
        %v2408 = vadd.f32 %v2151, %v2407
        %v2409 = vpop.f32.mrf.mxu0
        %v2410 = vadd.f32 %v2156, %v2409
        %2411 = vmatmul.bf16.gmra.mxu0 %v2294
        %v2412 = vpop.f32.mrf.mxu0
        %v2413 = vadd.f32 %v2161, %v2412
        %v2414 = vpop.f32.mrf.mxu0
        %v2415 = vadd.f32 %v2166, %v2414
        %2416 = vdwg.mxu0
        %2417 = vmatpush.bf16.msra.mxu0 %v1942
        %2418 = vmatpush.bf16.msra.mxu0 %v1940
        %2419 = vmatpush.bf16.msra.mxu0 %v1938
        %2420 = vmatpush.bf16.msra.mxu0 %v1936
        %2421 = vmatpush.bf16.msra.mxu0 %v1934
        %2422 = vmatpush.bf16.msra.mxu0 %v1932
        %2423 = vmatpush.bf16.msra.mxu0 %v1930
        %2424 = vmatpush.bf16.msra.mxu0 %v1928
        %2425 = vmatmul.bf16.gmra.mxu0 %v2265
        %v2426 = vpop.f32.mrf.mxu0
        %v2427 = vadd.f32 %v2338, %v2426
        %v2428 = vpop.f32.mrf.mxu0
        %v2429 = vadd.f32 %v2340, %v2428
        %2430 = vmatmul.bf16.gmra.mxu0 %v2267
        %v2431 = vpop.f32.mrf.mxu0
        %v2432 = vadd.f32 %v2343, %v2431
        %v2433 = vpop.f32.mrf.mxu0
        %v2434 = vadd.f32 %v2345, %v2433
        %2435 = vmatmul.bf16.gmra.mxu0 %v2269
        %v2436 = vpop.f32.mrf.mxu0
        %v2437 = vadd.f32 %v2348, %v2436
        %v2438 = vpop.f32.mrf.mxu0
        %v2439 = vadd.f32 %v2350, %v2438
        %2440 = vmatmul.bf16.gmra.mxu0 %v2271
        %v2441 = vpop.f32.mrf.mxu0
        %v2442 = vadd.f32 %v2353, %v2441
        %v2443 = vpop.f32.mrf.mxu0
        %v2444 = vadd.f32 %v2355, %v2443
        %2445 = vmatmul.bf16.gmra.mxu0 %v2273
        %v2446 = vpop.f32.mrf.mxu0
        %v2447 = vadd.f32 %v2358, %v2446
        %v2448 = vpop.f32.mrf.mxu0
        %v2449 = vadd.f32 %v2360, %v2448
        %2450 = vmatmul.bf16.gmra.mxu0 %v2275
        %v2451 = vpop.f32.mrf.mxu0
        %v2452 = vadd.f32 %v2363, %v2451
        %v2453 = vpop.f32.mrf.mxu0
        %v2454 = vadd.f32 %v2365, %v2453
        %2455 = vmatmul.bf16.gmra.mxu0 %v2277
        %v2456 = vpop.f32.mrf.mxu0
        %v2457 = vadd.f32 %v2368, %v2456
        %v2458 = vpop.f32.mrf.mxu0
        %v2459 = vadd.f32 %v2370, %v2458
        %2460 = vmatmul.bf16.gmra.mxu0 %v2279
        %v2461 = vpop.f32.mrf.mxu0
        %v2462 = vadd.f32 %v2373, %v2461
        %v2463 = vpop.f32.mrf.mxu0
        %v2464 = vadd.f32 %v2375, %v2463
        %2465 = vmatmul.bf16.gmra.mxu0 %v2281
        %v2466 = vpop.f32.mrf.mxu0
        %v2467 = vadd.f32 %v2378, %v2466
        %v2468 = vpop.f32.mrf.mxu0
        %v2469 = vadd.f32 %v2380, %v2468
        %2470 = vmatmul.bf16.gmra.mxu0 %v2283
        %v2471 = vpop.f32.mrf.mxu0
        %v2472 = vadd.f32 %v2383, %v2471
        %v2473 = vpop.f32.mrf.mxu0
        %v2474 = vadd.f32 %v2385, %v2473
        %2475 = vmatmul.bf16.gmra.mxu0 %v2285
        %v2476 = vpop.f32.mrf.mxu0
        %v2477 = vadd.f32 %v2388, %v2476
        %v2478 = vpop.f32.mrf.mxu0
        %v2479 = vadd.f32 %v2390, %v2478
        %2480 = vmatmul.bf16.gmra.mxu0 %v2287
        %v2481 = vpop.f32.mrf.mxu0
        %v2482 = vadd.f32 %v2393, %v2481
        %v2483 = vpop.f32.mrf.mxu0
        %v2484 = vadd.f32 %v2395, %v2483
        %2485 = vmatmul.bf16.gmra.mxu0 %v2289
        %v2486 = vpop.f32.mrf.mxu0
        %v2487 = vadd.f32 %v2398, %v2486
        %v2488 = vpop.f32.mrf.mxu0
        %v2489 = vadd.f32 %v2400, %v2488
        %2490 = vmatmul.bf16.gmra.mxu0 %v2291
        %v2491 = vpop.f32.mrf.mxu0
        %v2492 = vadd.f32 %v2403, %v2491
        %v2493 = vpop.f32.mrf.mxu0
        %v2494 = vadd.f32 %v2405, %v2493
        %2495 = vmatmul.bf16.gmra.mxu0 %v2293
        %v2496 = vpop.f32.mrf.mxu0
        %v2497 = vadd.f32 %v2408, %v2496
        %v2498 = vpop.f32.mrf.mxu0
        %v2499 = vadd.f32 %v2410, %v2498
        %2500 = vmatmul.bf16.gmra.mxu0 %v2295
        %v2501 = vpop.f32.mrf.mxu0
        %v2502 = vadd.f32 %v2413, %v2501
        %v2503 = vpop.f32.mrf.mxu0
        %v2504 = vadd.f32 %v2415, %v2503
        %2505 = vdwg.mxu0
        %2506 = vmatpush.bf16.msra.mxu0 %v1927
        %2507 = vmatpush.bf16.msra.mxu0 %v1925
        %2508 = vmatpush.bf16.msra.mxu0 %v1923
        %2509 = vmatpush.bf16.msra.mxu0 %v1921
        %2510 = vmatpush.bf16.msra.mxu0 %v1919
        %2511 = vmatpush.bf16.msra.mxu0 %v1917
        %2512 = vmatpush.bf16.msra.mxu0 %v1915
        %2513 = vmatpush.bf16.msra.mxu0 %v1913
        %2514 = vmatmul.bf16.gmra.mxu0 %v2264
        %v2515 = vpop.f32.mrf.mxu0
        %v2516 = vadd.f32 %v2011, %v2515
        %v2517 = vpop.f32.mrf.mxu0
        %v2518 = vadd.f32 %v2016, %v2517
        %2519 = vmatmul.bf16.gmra.mxu0 %v2266
        %v2520 = vpop.f32.mrf.mxu0
        %v2521 = vadd.f32 %v2021, %v2520
        %v2522 = vpop.f32.mrf.mxu0
        %v2523 = vadd.f32 %v2026, %v2522
        %2524 = vmatmul.bf16.gmra.mxu0 %v2268
        %v2525 = vpop.f32.mrf.mxu0
        %v2526 = vadd.f32 %v2031, %v2525
        %v2527 = vpop.f32.mrf.mxu0
        %v2528 = vadd.f32 %v2036, %v2527
        %2529 = vmatmul.bf16.gmra.mxu0 %v2270
        %v2530 = vpop.f32.mrf.mxu0
        %v2531 = vadd.f32 %v2041, %v2530
        %v2532 = vpop.f32.mrf.mxu0
        %v2533 = vadd.f32 %v2046, %v2532
        %2534 = vmatmul.bf16.gmra.mxu0 %v2272
        %v2535 = vpop.f32.mrf.mxu0
        %v2536 = vadd.f32 %v2051, %v2535
        %v2537 = vpop.f32.mrf.mxu0
        %v2538 = vadd.f32 %v2056, %v2537
        %2539 = vmatmul.bf16.gmra.mxu0 %v2274
        %v2540 = vpop.f32.mrf.mxu0
        %v2541 = vadd.f32 %v2061, %v2540
        %v2542 = vpop.f32.mrf.mxu0
        %v2543 = vadd.f32 %v2066, %v2542
        %2544 = vmatmul.bf16.gmra.mxu0 %v2276
        %v2545 = vpop.f32.mrf.mxu0
        %v2546 = vadd.f32 %v2071, %v2545
        %v2547 = vpop.f32.mrf.mxu0
        %v2548 = vadd.f32 %v2076, %v2547
        %2549 = vmatmul.bf16.gmra.mxu0 %v2278
        %v2550 = vpop.f32.mrf.mxu0
        %v2551 = vadd.f32 %v2081, %v2550
        %v2552 = vpop.f32.mrf.mxu0
        %v2553 = vadd.f32 %v2086, %v2552
        %2554 = vmatmul.bf16.gmra.mxu0 %v2280
        %v2555 = vpop.f32.mrf.mxu0
        %v2556 = vadd.f32 %v2091, %v2555
        %v2557 = vpop.f32.mrf.mxu0
        %v2558 = vadd.f32 %v2096, %v2557
        %2559 = vmatmul.bf16.gmra.mxu0 %v2282
        %v2560 = vpop.f32.mrf.mxu0
        %v2561 = vadd.f32 %v2101, %v2560
        %v2562 = vpop.f32.mrf.mxu0
        %v2563 = vadd.f32 %v2106, %v2562
        %2564 = vmatmul.bf16.gmra.mxu0 %v2284
        %v2565 = vpop.f32.mrf.mxu0
        %v2566 = vadd.f32 %v2111, %v2565
        %v2567 = vpop.f32.mrf.mxu0
        %v2568 = vadd.f32 %v2116, %v2567
        %2569 = vmatmul.bf16.gmra.mxu0 %v2286
        %v2570 = vpop.f32.mrf.mxu0
        %v2571 = vadd.f32 %v2121, %v2570
        %v2572 = vpop.f32.mrf.mxu0
        %v2573 = vadd.f32 %v2126, %v2572
        %2574 = vmatmul.bf16.gmra.mxu0 %v2288
        %v2575 = vpop.f32.mrf.mxu0
        %v2576 = vadd.f32 %v2131, %v2575
        %v2577 = vpop.f32.mrf.mxu0
        %v2578 = vadd.f32 %v2136, %v2577
        %2579 = vmatmul.bf16.gmra.mxu0 %v2290
        %v2580 = vpop.f32.mrf.mxu0
        %v2581 = vadd.f32 %v2141, %v2580
        %v2582 = vpop.f32.mrf.mxu0
        %v2583 = vadd.f32 %v2146, %v2582
        %2584 = vmatmul.bf16.gmra.mxu0 %v2292
        %v2585 = vpop.f32.mrf.mxu0
        %v2586 = vadd.f32 %v2151, %v2585
        %v2587 = vpop.f32.mrf.mxu0
        %v2588 = vadd.f32 %v2156, %v2587
        %2589 = vmatmul.bf16.gmra.mxu0 %v2294
        %v2590 = vpop.f32.mrf.mxu0
        %v2591 = vadd.f32 %v2161, %v2590
        %v2592 = vpop.f32.mrf.mxu0
        %v2593 = vadd.f32 %v2166, %v2592
        %2594 = vdwg.mxu0
        %2595 = vmatpush.bf16.msra.mxu0 %v1943
        %2596 = vmatpush.bf16.msra.mxu0 %v1941
        %2597 = vmatpush.bf16.msra.mxu0 %v1939
        %2598 = vmatpush.bf16.msra.mxu0 %v1937
        %2599 = vmatpush.bf16.msra.mxu0 %v1935
        %2600 = vmatpush.bf16.msra.mxu0 %v1933
        %2601 = vmatpush.bf16.msra.mxu0 %v1931
        %2602 = vmatpush.bf16.msra.mxu0 %v1929
        %2603 = vmatmul.bf16.gmra.mxu0 %v2265
        %v2604 = vpop.f32.mrf.mxu0
        %v2605 = vadd.f32 %v2516, %v2604
        %v2606 = vpop.f32.mrf.mxu0
        %v2607 = vadd.f32 %v2518, %v2606
        %2608 = vmatmul.bf16.gmra.mxu0 %v2267
        %v2609 = vpop.f32.mrf.mxu0
        %v2610 = vadd.f32 %v2521, %v2609
        %v2611 = vpop.f32.mrf.mxu0
        %v2612 = vadd.f32 %v2523, %v2611
        %2613 = vmatmul.bf16.gmra.mxu0 %v2269
        %v2614 = vpop.f32.mrf.mxu0
        %v2615 = vadd.f32 %v2526, %v2614
        %v2616 = vpop.f32.mrf.mxu0
        %v2617 = vadd.f32 %v2528, %v2616
        %2618 = vmatmul.bf16.gmra.mxu0 %v2271
        %v2619 = vpop.f32.mrf.mxu0
        %v2620 = vadd.f32 %v2531, %v2619
        %v2621 = vpop.f32.mrf.mxu0
        %v2622 = vadd.f32 %v2533, %v2621
        %2623 = vmatmul.bf16.gmra.mxu0 %v2273
        %v2624 = vpop.f32.mrf.mxu0
        %v2625 = vadd.f32 %v2536, %v2624
        %v2626 = vpop.f32.mrf.mxu0
        %v2627 = vadd.f32 %v2538, %v2626
        %2628 = vmatmul.bf16.gmra.mxu0 %v2275
        %v2629 = vpop.f32.mrf.mxu0
        %v2630 = vadd.f32 %v2541, %v2629
        %v2631 = vpop.f32.mrf.mxu0
        %v2632 = vadd.f32 %v2543, %v2631
        %2633 = vmatmul.bf16.gmra.mxu0 %v2277
        %v2634 = vpop.f32.mrf.mxu0
        %v2635 = vadd.f32 %v2546, %v2634
        %v2636 = vpop.f32.mrf.mxu0
        %v2637 = vadd.f32 %v2548, %v2636
        %2638 = vmatmul.bf16.gmra.mxu0 %v2279
        %v2639 = vpop.f32.mrf.mxu0
        %v2640 = vadd.f32 %v2551, %v2639
        %v2641 = vpop.f32.mrf.mxu0
        %v2642 = vadd.f32 %v2553, %v2641
        %2643 = vmatmul.bf16.gmra.mxu0 %v2281
        %v2644 = vpop.f32.mrf.mxu0
        %v2645 = vadd.f32 %v2556, %v2644
        %v2646 = vpop.f32.mrf.mxu0
        %v2647 = vadd.f32 %v2558, %v2646
        %2648 = vmatmul.bf16.gmra.mxu0 %v2283
        %v2649 = vpop.f32.mrf.mxu0
        %v2650 = vadd.f32 %v2561, %v2649
        %v2651 = vpop.f32.mrf.mxu0
        %v2652 = vadd.f32 %v2563, %v2651
        %2653 = vmatmul.bf16.gmra.mxu0 %v2285
        %v2654 = vpop.f32.mrf.mxu0
        %v2655 = vadd.f32 %v2566, %v2654
        %v2656 = vpop.f32.mrf.mxu0
        %v2657 = vadd.f32 %v2568, %v2656
        %2658 = vmatmul.bf16.gmra.mxu0 %v2287
        %v2659 = vpop.f32.mrf.mxu0
        %v2660 = vadd.f32 %v2571, %v2659
        %v2661 = vpop.f32.mrf.mxu0
        %v2662 = vadd.f32 %v2573, %v2661
        %2663 = vmatmul.bf16.gmra.mxu0 %v2289
        %v2664 = vpop.f32.mrf.mxu0
        %v2665 = vadd.f32 %v2576, %v2664
        %v2666 = vpop.f32.mrf.mxu0
        %v2667 = vadd.f32 %v2578, %v2666
        %2668 = vmatmul.bf16.gmra.mxu0 %v2291
        %v2669 = vpop.f32.mrf.mxu0
        %v2670 = vadd.f32 %v2581, %v2669
        %v2671 = vpop.f32.mrf.mxu0
        %v2672 = vadd.f32 %v2583, %v2671
        %2673 = vmatmul.bf16.gmra.mxu0 %v2293
        %v2674 = vpop.f32.mrf.mxu0
        %v2675 = vadd.f32 %v2586, %v2674
        %v2676 = vpop.f32.mrf.mxu0
        %v2677 = vadd.f32 %v2588, %v2676
        %2678 = vmatmul.bf16.gmra.mxu0 %v2295
        %v2679 = vpop.f32.mrf.mxu0
        %v2680 = vadd.f32 %v2591, %v2679
        %v2681 = vpop.f32.mrf.mxu0
        %v2682 = vadd.f32 %v2593, %v2681
        %2683 = vdwg.mxu0
        %v2684 = vmul.f32 %v2427, 0.01
        %v2685 = vmul.f32 %v2605, 0.01
        %v2686 = vmul.f32 %v2429, 0.01
        %v2687 = vmul.f32 %v2607, 0.01
        %v2688 = vmul.f32 %v2432, 0.01
        %v2689 = vmul.f32 %v2610, 0.01
        %v2690 = vmul.f32 %v2434, 0.01
        %v2691 = vmul.f32 %v2612, 0.01
        %v2692 = vmul.f32 %v2437, 0.01
        %v2693 = vmul.f32 %v2615, 0.01
        %v2694 = vmul.f32 %v2439, 0.01
        %v2695 = vmul.f32 %v2617, 0.01
        %v2696 = vmul.f32 %v2442, 0.01
        %v2697 = vmul.f32 %v2620, 0.01
        %v2698 = vmul.f32 %v2444, 0.01
        %v2699 = vmul.f32 %v2622, 0.01
        %v2700 = vmul.f32 %v2447, 0.01
        %v2701 = vmul.f32 %v2625, 0.01
        %v2702 = vmul.f32 %v2449, 0.01
        %v2703 = vmul.f32 %v2627, 0.01
        %v2704 = vmul.f32 %v2452, 0.01
        %v2705 = vmul.f32 %v2630, 0.01
        %v2706 = vmul.f32 %v2454, 0.01
        %v2707 = vmul.f32 %v2632, 0.01
        %v2708 = vmul.f32 %v2457, 0.01
        %v2709 = vmul.f32 %v2635, 0.01
        %v2710 = vmul.f32 %v2459, 0.01
        %v2711 = vmul.f32 %v2637, 0.01
        %v2712 = vmul.f32 %v2462, 0.01
        %v2713 = vmul.f32 %v2640, 0.01
        %v2714 = vmul.f32 %v2464, 0.01
        %v2715 = vmul.f32 %v2642, 0.01
        %v2716 = vmul.f32 %v2467, 0.01
        %v2717 = vmul.f32 %v2645, 0.01
        %v2718 = vmul.f32 %v2469, 0.01
        %v2719 = vmul.f32 %v2647, 0.01
        %v2720 = vmul.f32 %v2472, 0.01
        %v2721 = vmul.f32 %v2650, 0.01
        %v2722 = vmul.f32 %v2474, 0.01
        %v2723 = vmul.f32 %v2652, 0.01
        %v2724 = vmul.f32 %v2477, 0.01
        %v2725 = vmul.f32 %v2655, 0.01
        %v2726 = vmul.f32 %v2479, 0.01
        %v2727 = vmul.f32 %v2657, 0.01
        %v2728 = vmul.f32 %v2482, 0.01
        %v2729 = vmul.f32 %v2660, 0.01
        %v2730 = vmul.f32 %v2484, 0.01
        %v2731 = vmul.f32 %v2662, 0.01
        %v2732 = vmul.f32 %v2487, 0.01
        %v2733 = vmul.f32 %v2665, 0.01
        %v2734 = vmul.f32 %v2489, 0.01
        %v2735 = vmul.f32 %v2667, 0.01
        %v2736 = vmul.f32 %v2492, 0.01
        %v2737 = vmul.f32 %v2670, 0.01
        %v2738 = vmul.f32 %v2494, 0.01
        %v2739 = vmul.f32 %v2672, 0.01
        %v2740 = vmul.f32 %v2497, 0.01
        %v2741 = vmul.f32 %v2675, 0.01
        %v2742 = vmul.f32 %v2499, 0.01
        %v2743 = vmul.f32 %v2677, 0.01
        %v2744 = vmul.f32 %v2502, 0.01
        %v2745 = vmul.f32 %v2680, 0.01
        %v2746 = vmul.f32 %v2504, 0.01
        %v2747 = vmul.f32 %v2682, 0.01
        %v2748 = vmax.f32 %v2427, %v2684
        %v2749 = vmax.f32 %v2605, %v2685
        %v2750 = vmax.f32 %v2429, %v2686
        %v2751 = vmax.f32 %v2607, %v2687
        %v2752 = vmax.f32 %v2432, %v2688
        %v2753 = vmax.f32 %v2610, %v2689
        %v2754 = vmax.f32 %v2434, %v2690
        %v2755 = vmax.f32 %v2612, %v2691
        %v2756 = vmax.f32 %v2437, %v2692
        %v2757 = vmax.f32 %v2615, %v2693
        %v2758 = vmax.f32 %v2439, %v2694
        %v2759 = vmax.f32 %v2617, %v2695
        %v2760 = vmax.f32 %v2442, %v2696
        %v2761 = vmax.f32 %v2620, %v2697
        %v2762 = vmax.f32 %v2444, %v2698
        %v2763 = vmax.f32 %v2622, %v2699
        %v2764 = vmax.f32 %v2447, %v2700
        %v2765 = vmax.f32 %v2625, %v2701
        %v2766 = vmax.f32 %v2449, %v2702
        %v2767 = vmax.f32 %v2627, %v2703
        %v2768 = vmax.f32 %v2452, %v2704
        %v2769 = vmax.f32 %v2630, %v2705
        %v2770 = vmax.f32 %v2454, %v2706
        %v2771 = vmax.f32 %v2632, %v2707
        %v2772 = vmax.f32 %v2457, %v2708
        %v2773 = vmax.f32 %v2635, %v2709
        %v2774 = vmax.f32 %v2459, %v2710
        %v2775 = vmax.f32 %v2637, %v2711
        %v2776 = vmax.f32 %v2462, %v2712
        %v2777 = vmax.f32 %v2640, %v2713
        %v2778 = vmax.f32 %v2464, %v2714
        %v2779 = vmax.f32 %v2642, %v2715
        %v2780 = vmax.f32 %v2467, %v2716
        %v2781 = vmax.f32 %v2645, %v2717
        %v2782 = vmax.f32 %v2469, %v2718
        %v2783 = vmax.f32 %v2647, %v2719
        %v2784 = vmax.f32 %v2472, %v2720
        %v2785 = vmax.f32 %v2650, %v2721
        %v2786 = vmax.f32 %v2474, %v2722
        %v2787 = vmax.f32 %v2652, %v2723
        %v2788 = vmax.f32 %v2477, %v2724
        %v2789 = vmax.f32 %v2655, %v2725
        %v2790 = vmax.f32 %v2479, %v2726
        %v2791 = vmax.f32 %v2657, %v2727
        %v2792 = vmax.f32 %v2482, %v2728
        %v2793 = vmax.f32 %v2660, %v2729
        %v2794 = vmax.f32 %v2484, %v2730
        %v2795 = vmax.f32 %v2662, %v2731
        %v2796 = vmax.f32 %v2487, %v2732
        %v2797 = vmax.f32 %v2665, %v2733
        %v2798 = vmax.f32 %v2489, %v2734
        %v2799 = vmax.f32 %v2667, %v2735
        %v2800 = vmax.f32 %v2492, %v2736
        %v2801 = vmax.f32 %v2670, %v2737
        %v2802 = vmax.f32 %v2494, %v2738
        %v2803 = vmax.f32 %v2672, %v2739
        %v2804 = vmax.f32 %v2497, %v2740
        %v2805 = vmax.f32 %v2675, %v2741
        %v2806 = vmax.f32 %v2499, %v2742
        %v2807 = vmax.f32 %v2677, %v2743
        %v2808 = vmax.f32 %v2502, %v2744
        %v2809 = vmax.f32 %v2680, %v2745
        %v2810 = vmax.f32 %v2504, %v2746
        %v2811 = vmax.f32 %v2682, %v2747
        %v2812 = vld [vmem:[%s7] sm:$0xff]
        %v2813 = vld [vmem:[%s7 + $0x8] sm:$0xff]
        %2814 = vmatpush.msra.mxu0 %v2778
        %2815 = vmatpush.msra.mxu0 %v2776
        %2816 = vmatpush.msra.mxu0 %v2774
        %2817 = vmatpush.msra.mxu0 %v2772
        %2818 = vmatpush.msra.mxu0 %v2770
        %2819 = vmatpush.msra.mxu0 %v2768
        %2820 = vmatpush.msra.mxu0 %v2766
        %2821 = vmatpush.msra.mxu0 %v2764
        %2822 = vmatpush.msra.mxu0 %v2762
        %2823 = vmatpush.msra.mxu0 %v2760
        %2824 = vmatpush.msra.mxu0 %v2758
        %2825 = vmatpush.msra.mxu0 %v2756
        %2826 = vmatpush.msra.mxu0 %v2754
        %2827 = vmatpush.msra.mxu0 %v2752
        %2828 = vmatpush.msra.mxu0 %v2750
        %2829 = vmatpush.msra.mxu0 %v2748
        %2830 = vmatmul.f32.gmra.mxu0 %v2812
        %v2831 = vpop.f32.mrf.mxu0
        %v2832 = vadd.f32 0.0, %v2831
        %2833 = vdwg.mxu0
        %2834 = vmatpush.msra.mxu0 %v2810
        %2835 = vmatpush.msra.mxu0 %v2808
        %2836 = vmatpush.msra.mxu0 %v2806
        %2837 = vmatpush.msra.mxu0 %v2804
        %2838 = vmatpush.msra.mxu0 %v2802
        %2839 = vmatpush.msra.mxu0 %v2800
        %2840 = vmatpush.msra.mxu0 %v2798
        %2841 = vmatpush.msra.mxu0 %v2796
        %2842 = vmatpush.msra.mxu0 %v2794
        %2843 = vmatpush.msra.mxu0 %v2792
        %2844 = vmatpush.msra.mxu0 %v2790
        %2845 = vmatpush.msra.mxu0 %v2788
        %2846 = vmatpush.msra.mxu0 %v2786
        %2847 = vmatpush.msra.mxu0 %v2784
        %2848 = vmatpush.msra.mxu0 %v2782
        %2849 = vmatpush.msra.mxu0 %v2780
        %2850 = vmatmul.f32.gmra.mxu0 %v2813
        %v2851 = vpop.f32.mrf.mxu0
        %v2852 = vadd.f32 %v2832, %v2851
        %2853 = vdwg.mxu0
        %2854 = vmatpush.msra.mxu0 %v2779
        %2855 = vmatpush.msra.mxu0 %v2777
        %2856 = vmatpush.msra.mxu0 %v2775
        %2857 = vmatpush.msra.mxu0 %v2773
        %2858 = vmatpush.msra.mxu0 %v2771
        %2859 = vmatpush.msra.mxu0 %v2769
        %2860 = vmatpush.msra.mxu0 %v2767
        %2861 = vmatpush.msra.mxu0 %v2765
        %2862 = vmatpush.msra.mxu0 %v2763
        %2863 = vmatpush.msra.mxu0 %v2761
        %2864 = vmatpush.msra.mxu0 %v2759
        %2865 = vmatpush.msra.mxu0 %v2757
        %2866 = vmatpush.msra.mxu0 %v2755
        %2867 = vmatpush.msra.mxu0 %v2753
        %2868 = vmatpush.msra.mxu0 %v2751
        %2869 = vmatpush.msra.mxu0 %v2749
        %2870 = vmatmul.f32.gmra.mxu0 %v2812
        %v2871 = vpop.f32.mrf.mxu0
        %v2872 = vadd.f32 0.0, %v2871
        %2873 = vdwg.mxu0
        %2874 = vmatpush.msra.mxu0 %v2811
        %2875 = vmatpush.msra.mxu0 %v2809
        %2876 = vmatpush.msra.mxu0 %v2807
        %2877 = vmatpush.msra.mxu0 %v2805
        %2878 = vmatpush.msra.mxu0 %v2803
        %2879 = vmatpush.msra.mxu0 %v2801
        %2880 = vmatpush.msra.mxu0 %v2799
        %2881 = vmatpush.msra.mxu0 %v2797
        %2882 = vmatpush.msra.mxu0 %v2795
        %2883 = vmatpush.msra.mxu0 %v2793
        %2884 = vmatpush.msra.mxu0 %v2791
        %2885 = vmatpush.msra.mxu0 %v2789
        %2886 = vmatpush.msra.mxu0 %v2787
        %2887 = vmatpush.msra.mxu0 %v2785
        %2888 = vmatpush.msra.mxu0 %v2783
        %2889 = vmatpush.msra.mxu0 %v2781
        %2890 = vmatmul.f32.gmra.mxu0 %v2813
        %v2891 = vpop.f32.mrf.mxu0
        %v2892 = vadd.f32 %v2872, %v2891
        %2893 = vdwg.mxu0
        %s2894 = sld [smem:[#allocation2]]
        %v2895 = vstv %s2894
        %v2896 = vadd.f32 %v2852, %v2895
        %v2897 = vadd.f32 %v2892, %v2895
        %v2898 = vxor.u32 %v2896, 2147483648
        %v2899 = vxor.u32 %v2897, 2147483648
        %v2900 = vmul.f32 %v2898, 1.442695
        %v2901 = vpow.pop %v2900
        %v2902 = vmul.f32 %v2899, 1.442695
        %v2903 = vpow.pop %v2902
        %v2904 = vadd.f32 %v2901, 1.0
        %v2905 = vadd.f32 %v2903, 1.0
        %v2906 = vrcp.pop %v2904
        %v2907 = vmul.f32 %v2904, %v2906
        %v2908 = vsub.f32 1.0, %v2907
        %v2909 = vmul.f32 %v2906, %v2908
        %v2910 = vadd.f32 %v2906, %v2909
        %vm2911 = vweird.f32 %v2904
        %vm2912 = vweird.f32 %v2906
        %vm2913 = vmor %vm2911, %vm2912
        %v2914 = vsel %vm2913, %v2906, %v2910
        %v2915 = vand.u32 2147483647, %v2904
        %vm2916 = vcmp.eq.f32.partialorder %v2915, 8.507059e+37
        %v2917 = vand.u32 %v2904, 2147483648
        %v2918 = vor.u32 1.1754944e-38, %v2917
        %v2919 = vsel %vm2916, %v2918, %v2914
        %v2920 = vmul.f32 1.0, %v2919
        %v2921 = vrcp.pop %v2905
        %v2922 = vmul.f32 %v2905, %v2921
        %v2923 = vsub.f32 1.0, %v2922
        %v2924 = vmul.f32 %v2921, %v2923
        %v2925 = vadd.f32 %v2921, %v2924
        %vm2926 = vweird.f32 %v2905
        %vm2927 = vweird.f32 %v2921
        %vm2928 = vmor %vm2926, %vm2927
        %v2929 = vsel %vm2928, %v2921, %v2925
        %v2930 = vand.u32 2147483647, %v2905
        %vm2931 = vcmp.eq.f32.partialorder %v2930, 8.507059e+37
        %v2932 = vand.u32 %v2905, 2147483648
        %v2933 = vor.u32 1.1754944e-38, %v2932
        %v2934 = vsel %vm2931, %v2933, %v2929
        %v2935 = vmul.f32 1.0, %v2934
        %v2938 = vrot.slane %v2935, 7
        %vm2939 = vcmask 1040384
        %v2940 = vsel %vm2939, %v2920, %v2938
        %v2942 = vlaneseq
        %vm2943 = vcmp.ge.s32.totalorder %v2942, 0
        %vm2944 = vcmp.lt.s32.totalorder %v2942, 256
        %vm2945 = vmand %vm2943, %vm2944
        %2946 = vst.msk [vmem:[%s327] sm:$0x3] %vm2945, %v2940
        %s2947 = sand.u32 %s226, 1
        %s2948 = scalar_lea.sflag [#allocation4], %s2947
        %s2949 = sand.u32 %s226, 1
        %s2950 = smul.addr %s2949, 2
        %s2951 = scalar_lea.vmem [#allocation3], %s2950
        // Predicated region
        $region57: #{tpu_custom_call.1} parent=55 // pred_check
          %p2952 = pneg %p236
        $region58: #{tpu_custom_call.1} parent=55 // pred_check_branch
          %2954 = sbr.rel (%p2952) target = $region60
        $region59: #{tpu_custom_call.1} parent=55 // pred_region
          %s2955 = smul.u32 2, %s24
          %2957 = vsyncadd %s2948, 0
          %s2958 = scalar_lea.hbm %s9, %s2955
          %s2960 = sshll.u32 %s2951, 4
          %s2961 = int_to_ptr.vmem [resolvable:$true] %s2960
          %s2962 = sshll.u32 %s2958, 4
          %s2963 = int_to_ptr.hbm [resolvable:$true] %s2962
          %2965 = dma.vmem_to_hbm [thread:$0]  %s2961, 32, %s2963, %s2948
        $region60: #{tpu_custom_call.1} parent=55 // pred_fallthru
          _
      $region56: #{tpu_custom_call.1} parent=5 // pred_fallthru
        _
      %p2966 = scmp.le.s32.totalorder 2, %s19
      // Predicated region
      $region61: #{tpu_custom_call.1} parent=5 // pred_check
        %p2967 = pneg %p2966
      $region62: #{tpu_custom_call.1} parent=5 // pred_check_branch
        %2969 = sbr.rel (%p2967) target = $region64
      $region63: #{tpu_custom_call.1} parent=5 // pred_region
        %s2970 = ssub.s32 %s19, 2
        // Predicated region
        $region65: #{tpu_custom_call.1} parent=63 // pred_check
          %p2971 = pneg %p242
        $region66: #{tpu_custom_call.1} parent=63 // pred_check_branch
          %2973 = sbr.rel (%p2971) target = $region68
        $region67: #{tpu_custom_call.1} parent=63 // pred_region
          %s2974 = sand.u32 %s227, 1
          %s2975 = scalar_lea.sflag [#allocation4], %s2974
          %s2976 = sand.u32 %s227, 1
          %s2977 = smul.addr %s2976, 2
          %s2978 = scalar_lea.vmem [#allocation3], %s2977
          %2980 = dma.done %s2975, 32
        $region68: #{tpu_custom_call.1} parent=63 // pred_fallthru
          _
      $region64: #{tpu_custom_call.1} parent=5 // pred_fallthru
        _
    $region6: #{tpu_custom_call.1} parent=1 // loop_footer
      %s23 = sadd.s32 1, %s19
    $region7: #{tpu_custom_call.1} parent=1 // loop_footer_branch
      %18 = sbr.rel target = $region3
    $region8: #{tpu_custom_call.1} parent=1 // loop_exit
      _
    %2981 = vsyncpa [#allocation4], 1
    %s2982 = scalar_lea.sflag [#allocation4], 1
    %2983 = vsyncpa %s2982, 1

</llo_original>
